<compile_context>
chip_gen: v5e
topology: v5e:2x2
jax: 0.10.0
libtpu: 0.0.40
codegen_flags: <defaults>
</compile_context>

<pallas_src>
import jax
import jax.numpy as jnp
from jax.experimental import pallas as pl
from jax.experimental.pallas import tpu as pltpu


def _drqn_lstm_kernel(x_ref, h0_ref, c0_ref,
                      w1_ref, b1_ref, wih_ref, whh_ref, bg_ref,
                      w2_ref, b2_ref,
                      y_ref, h_out_ref, c_out_ref):
    T, B, S = x_ref.shape          # time-major shard: (T, Bs, n_states)
    H = h0_ref.shape[-1]
    A = y_ref.shape[-1]

    # ---- Time-parallel projections over all T*B rows at once ----
    # (T, B, S) -> (T*B, S) is layout-trivial when B is a multiple of 8.
    x_flat = x_ref[...].reshape(T * B, S)
    z = jnp.dot(x_flat, w1_ref[...], preferred_element_type=jnp.float32) + b1_ref[...]
    z = jnp.maximum(z, 0.0)
    gates_x = jnp.dot(z, wih_ref[...], preferred_element_type=jnp.float32) + bg_ref[...]
    # gates_x: (T*B, 4H), gate columns ordered (i, f, o, g), rows time-major.

    # ---- Serial recurrence: only h @ W_hh + nonlinearities on the critical path ----
    whh = whh_ref[...]
    h_t = h0_ref[0].astype(jnp.float32)          # (B, H)
    c_t = c0_ref[0].astype(jnp.float32)
    hs = []
    for t in range(T):                           # static, fully unrolled
        gates = gates_x[t * B:(t + 1) * B, :] + jnp.dot(
            h_t, whh, preferred_element_type=jnp.float32)
        sig = jax.nn.sigmoid(gates[:, :3 * H])   # (i, f, o) in one EUP pass
        g_g = jnp.tanh(gates[:, 3 * H:])
        i_g = sig[:, 0 * H:1 * H]
        f_g = sig[:, 1 * H:2 * H]
        o_g = sig[:, 2 * H:3 * H]
        c_t = f_g * c_t + i_g * g_g
        h_t = o_g * jnp.tanh(c_t)
        hs.append(h_t)                           # stays in vregs; no VMEM scratch

    # ---- Hoisted output projection + single end-of-kernel stores ----
    h_seq = jnp.concatenate(hs, axis=0)          # (T*B, H), time-major
    y = jnp.dot(h_seq, w2_ref[...], preferred_element_type=jnp.float32) + b2_ref[...]
    y_ref[...] = y.reshape(T, B, A).astype(y_ref.dtype)
    h_out_ref[0] = h_t.astype(h_out_ref.dtype)
    c_out_ref[0] = c_t.astype(c_out_ref.dtype)


def prepare_params(params):
    """One-time weight preprocessing. Call at init / after parameter updates,
    NOT per forward call (keeps ~8 tiny HLO ops out of the hot path)."""
    H = params["w1"].shape[0]

    # Reorder LSTM gate blocks from PyTorch (i, f, g, o) to (i, f, o, g).
    def reorder(w):
        return jnp.concatenate(
            [w[0:H], w[H:2 * H], w[3 * H:4 * H], w[2 * H:3 * H]], axis=0)

    return {
        "w1t":   params["w1"].T,                                  # (n_states, H)
        "b1":    params["b1"][None, :],                           # (1, H)
        "wih_t": reorder(params["w_ih"]).T,                       # (H, 4H)
        "whh_t": reorder(params["w_hh"]).T,                       # (H, 4H)
        "bg":    reorder(params["b_ih"] + params["b_hh"])[None, :],  # (1, 4H)
        "w2t":   params["w2"].T,                                  # (H, n_actions)
        "b2":    params["b2"][None, :],                           # (1, n_actions)
    }


def lstm_forward(x, h, c, prep):
    """x: (batch, seq, n_states); h, c: (1, batch, hidden); prep from prepare_params.
    Returns (y, h_out, c_out) with y: (batch, seq, n_actions)."""
    B, T, S = x.shape
    H = prep["w1t"].shape[1]
    A = prep["w2t"].shape[1]

    # Shard the batch across a parallel grid axis (uses both v7x TensorCores).
    # Keep each shard's batch a multiple of 8 so sublanes stay full and the
    # kernel-side (T, Bs, S) -> (T*Bs, S) merge stays layout-trivial.
    shards = 2 if (B % 16 == 0) else 1
    Bs = B // shards

    # Layout plumbing in the wrapper (cheap XLA ops), not in the kernel:
    # time-major so each step's gate rows are one contiguous sublane-aligned block.
    x_tm = jnp.transpose(x, (1, 0, 2))            # (T, B, S)

    def wspec(shape):
        return pl.BlockSpec(shape, lambda s: tuple(0 for _ in shape))

    y_tm, h_out, c_out = pl.pallas_call(
        _drqn_lstm_kernel,
        grid=(shards,),
        in_specs=[
            pl.BlockSpec((T, Bs, S), lambda s: (0, s, 0)),
            pl.BlockSpec((1, Bs, H), lambda s: (0, s, 0)),
            pl.BlockSpec((1, Bs, H), lambda s: (0, s, 0)),
            wspec((S, H)), wspec((1, H)),
            wspec((H, 4 * H)), wspec((H, 4 * H)), wspec((1, 4 * H)),
            wspec((H, A)), wspec((1, A)),
        ],
        out_specs=[
            pl.BlockSpec((T, Bs, A), lambda s: (0, s, 0)),
            pl.BlockSpec((1, Bs, H), lambda s: (0, s, 0)),
            pl.BlockSpec((1, Bs, H), lambda s: (0, s, 0)),
        ],
        out_shape=(
            jax.ShapeDtypeStruct((T, B, A), x.dtype),
            jax.ShapeDtypeStruct((1, B, H), h.dtype),
            jax.ShapeDtypeStruct((1, B, H), c.dtype),
        ),
        compiler_params=pltpu.CompilerParams(
            dimension_semantics=("parallel",)),
    )(x_tm, h, c,
      prep["w1t"], prep["b1"], prep["wih_t"], prep["whh_t"], prep["bg"],
      prep["w2t"], prep["b2"])

    y = jnp.transpose(y_tm, (1, 0, 2))            # back to (B, T, A)
    return y, h_out, c_out


def _reference_forward(x, h, c, params):
    """Pure-JAX reference matching PyTorch semantics (for correctness check)."""
    H = params["w1"].shape[0]
    z = jnp.maximum(x @ params["w1"].T + params["b1"], 0.0)   # (B, T, H)
    h_t = h[0]
    c_t = c[0]
    ys = []
    for t in range(z.shape[1]):
        gates = (z[:, t] @ params["w_ih"].T + params["b_ih"]
                 + h_t @ params["w_hh"].T + params["b_hh"])
        i_g = jax.nn.sigmoid(gates[:, 0 * H:1 * H])
        f_g = jax.nn.sigmoid(gates[:, 1 * H:2 * H])
        g_g = jnp.tanh(gates[:, 2 * H:3 * H])
        o_g = jax.nn.sigmoid(gates[:, 3 * H:4 * H])
        c_t = f_g * c_t + i_g * g_g
        h_t = o_g * jnp.tanh(c_t)
        ys.append(h_t)
    hs = jnp.stack(ys, axis=1)                                # (B, T, H)
    y = hs @ params["w2"].T + params["b2"]
    return y, h_t[None], c_t[None]


def init_params(key, n_states, n_actions, hidden_dim):
    ks = jax.random.split(key, 8)
    u = lambda k, shape, bound: jax.random.uniform(
        k, shape, jnp.float32, -bound, bound)
    b1_bound = 1.0 / jnp.sqrt(n_states)
    bl_bound = 1.0 / jnp.sqrt(hidden_dim)
    return {
        "w1":   u(ks[0], (hidden_dim, n_states), b1_bound),
        "b1":   u(ks[1], (hidden_dim,), b1_bound),
        "w_ih": u(ks[2], (4 * hidden_dim, hidden_dim), bl_bound),
        "w_hh": u(ks[3], (4 * hidden_dim, hidden_dim), bl_bound),
        "b_ih": u(ks[4], (4 * hidden_dim,), bl_bound),
        "b_hh": u(ks[5], (4 * hidden_dim,), bl_bound),
        "w2":   u(ks[6], (n_actions, hidden_dim), bl_bound),
        "b2":   u(ks[7], (n_actions,), bl_bound),
    }


if __name__ == "__main__":
    # batch=16 fills the 8 sublanes per shard (2 shards) per the perf review.
    batch, seq, n_states, n_actions, hidden = 16, 8, 16, 4, 32

    key = jax.random.PRNGKey(0)
    k_params, k_x, k_h, k_c = jax.random.split(key, 4)
    params = init_params(k_params, n_states, n_actions, hidden)
    prep = prepare_params(params)          # one-time, outside the hot path

    x = jax.random.normal(k_x, (batch, seq, n_states), jnp.float32)
    h0 = jax.random.normal(k_h, (1, batch, hidden), jnp.float32)
    c0 = jax.random.normal(k_c, (1, batch, hidden), jnp.float32)

    y, h_out, c_out = jax.jit(lstm_forward)(x, h0, c0, prep)
    jax.block_until_ready((y, h_out, c_out))

    y_ref, h_ref, c_ref = _reference_forward(x, h0, c0, params)
    assert jnp.allclose(y, y_ref, atol=1e-4, rtol=1e-4)
    assert jnp.allclose(h_out, h_ref, atol=1e-4, rtol=1e-4)
    assert jnp.allclose(c_out, c_ref, atol=1e-4, rtol=1e-4)

    print("KERNEL_OK")
</pallas_src>

<mosaic_0001>
module attributes {stable_mosaic.version = 11 : i64} {
  func.func @_drqn_lstm_kernel(%arg0: i32, %arg1: memref<8x8x16xf32, #tpu.memory_space<vmem>>, %arg2: memref<1x8x32xf32, #tpu.memory_space<vmem>>, %arg3: memref<1x8x32xf32, #tpu.memory_space<vmem>>, %arg4: memref<16x32xf32, #tpu.memory_space<vmem>>, %arg5: memref<1x32xf32, #tpu.memory_space<vmem>>, %arg6: memref<32x128xf32, #tpu.memory_space<vmem>>, %arg7: memref<32x128xf32, #tpu.memory_space<vmem>>, %arg8: memref<1x128xf32, #tpu.memory_space<vmem>>, %arg9: memref<32x4xf32, #tpu.memory_space<vmem>>, %arg10: memref<1x4xf32, #tpu.memory_space<vmem>>, %arg11: memref<8x8x4xf32, #tpu.memory_space<vmem>>, %arg12: memref<1x8x32xf32, #tpu.memory_space<vmem>>, %arg13: memref<1x8x32xf32, #tpu.memory_space<vmem>>) attributes {dimension_semantics = [#tpu.dimension_semantics<parallel>], iteration_bounds = array<i64: 2>, scalar_prefetch = 0 : i64, scratch_operands = 0 : i64, tpu.core_type = #tpu.core_type<tc>, window_params = [{transform_indices = @transform_0, window_bounds = array<i64: 8, 8, 16>}, {transform_indices = @transform_1, window_bounds = array<i64: 1, 8, 32>}, {transform_indices = @transform_2, window_bounds = array<i64: 1, 8, 32>}, {pipeline_mode = #tpu.pipeline_mode<synchronous>, transform_indices = @transform_3, window_bounds = array<i64: 16, 32>}, {pipeline_mode = #tpu.pipeline_mode<synchronous>, transform_indices = @transform_4, window_bounds = array<i64: 1, 32>}, {pipeline_mode = #tpu.pipeline_mode<synchronous>, transform_indices = @transform_5, window_bounds = array<i64: 32, 128>}, {pipeline_mode = #tpu.pipeline_mode<synchronous>, transform_indices = @transform_6, window_bounds = array<i64: 32, 128>}, {pipeline_mode = #tpu.pipeline_mode<synchronous>, transform_indices = @transform_7, window_bounds = array<i64: 1, 128>}, {pipeline_mode = #tpu.pipeline_mode<synchronous>, transform_indices = @transform_8, window_bounds = array<i64: 32, 4>}, {pipeline_mode = #tpu.pipeline_mode<synchronous>, transform_indices = @transform_9, window_bounds = array<i64: 1, 4>}, {transform_indices = @transform_10, window_bounds = array<i64: 8, 8, 4>}, {transform_indices = @transform_11, window_bounds = array<i64: 1, 8, 32>}, {transform_indices = @transform_12, window_bounds = array<i64: 1, 8, 32>}]} {
    %c0 = arith.constant 0 : index
    %c0_0 = arith.constant 0 : index
    %c0_1 = arith.constant 0 : index
    %0 = vector.load %arg1[%c0, %c0_0, %c0_1] : memref<8x8x16xf32, #tpu.memory_space<vmem>>, vector<8x8x16xf32>
    %1 = vector.shape_cast %0 : vector<8x8x16xf32> to vector<64x16xf32>
    %c0_2 = arith.constant 0 : index
    %c0_3 = arith.constant 0 : index
    %2 = vector.load %arg4[%c0_2, %c0_3] : memref<16x32xf32, #tpu.memory_space<vmem>>, vector<16x32xf32>
    %cst = arith.constant dense<0.000000e+00> : vector<64x32xf32>
    %3 = tpu.matmul %1, %2, %cst {dimension_numbers = #tpu.dot_dimension_numbers<[1], [0], [0], [1], [0, 0, 1, 1], [], []>} : vector<64x16xf32>, vector<16x32xf32>, vector<64x32xf32> -> vector<64x32xf32>
    %c0_4 = arith.constant 0 : index
    %c0_5 = arith.constant 0 : index
    %4 = vector.load %arg5[%c0_4, %c0_5] : memref<1x32xf32, #tpu.memory_space<vmem>>, vector<1x32xf32>
    %5 = vector.broadcast %4 : vector<1x32xf32> to vector<64x32xf32>
    %6 = arith.addf %3, %5 : vector<64x32xf32>
    %cst_6 = arith.constant 0.000000e+00 : f32
    %7 = vector.broadcast %cst_6 : f32 to vector<64x32xf32>
    %8 = arith.maximumf %6, %7 : vector<64x32xf32>
    %c0_7 = arith.constant 0 : index
    %c0_8 = arith.constant 0 : index
    %9 = vector.load %arg6[%c0_7, %c0_8] : memref<32x128xf32, #tpu.memory_space<vmem>>, vector<32x128xf32>
    %cst_9 = arith.constant dense<0.000000e+00> : vector<64x128xf32>
    %10 = tpu.matmul %8, %9, %cst_9 {dimension_numbers = #tpu.dot_dimension_numbers<[1], [0], [0], [1], [0, 0, 1, 1], [], []>} : vector<64x32xf32>, vector<32x128xf32>, vector<64x128xf32> -> vector<64x128xf32>
    %c0_10 = arith.constant 0 : index
    %c0_11 = arith.constant 0 : index
    %11 = vector.load %arg8[%c0_10, %c0_11] : memref<1x128xf32, #tpu.memory_space<vmem>>, vector<1x128xf32>
    %12 = vector.broadcast %11 : vector<1x128xf32> to vector<64x128xf32>
    %13 = arith.addf %10, %12 : vector<64x128xf32>
    %c0_12 = arith.constant 0 : index
    %c0_13 = arith.constant 0 : index
    %14 = vector.load %arg7[%c0_12, %c0_13] : memref<32x128xf32, #tpu.memory_space<vmem>>, vector<32x128xf32>
    %c0_14 = arith.constant 0 : index
    %c0_15 = arith.constant 0 : index
    %c0_16 = arith.constant 0 : index
    %15 = vector.load %arg2[%c0_14, %c0_15, %c0_16] : memref<1x8x32xf32, #tpu.memory_space<vmem>>, vector<1x8x32xf32>
    %16 = vector.shape_cast %15 : vector<1x8x32xf32> to vector<8x32xf32>
    %c0_17 = arith.constant 0 : index
    %c0_18 = arith.constant 0 : index
    %c0_19 = arith.constant 0 : index
    %17 = vector.load %arg3[%c0_17, %c0_18, %c0_19] : memref<1x8x32xf32, #tpu.memory_space<vmem>>, vector<1x8x32xf32>
    %18 = vector.shape_cast %17 : vector<1x8x32xf32> to vector<8x32xf32>
    %19 = vector.extract_strided_slice %13 {offsets = [0, 0], sizes = [8, 128], strides = [1, 1]} : vector<64x128xf32> to vector<8x128xf32>
    %cst_20 = arith.constant dense<0.000000e+00> : vector<8x128xf32>
    %20 = tpu.matmul %16, %14, %cst_20 {dimension_numbers = #tpu.dot_dimension_numbers<[1], [0], [0], [1], [0, 0, 1, 1], [], []>} : vector<8x32xf32>, vector<32x128xf32>, vector<8x128xf32> -> vector<8x128xf32>
    %21 = arith.addf %19, %20 : vector<8x128xf32>
    %22 = vector.extract_strided_slice %21 {offsets = [0, 0], sizes = [8, 96], strides = [1, 1]} : vector<8x128xf32> to vector<8x96xf32>
    %23 = arith.negf %22 : vector<8x96xf32>
    %24 = math.exp %23 : vector<8x96xf32>
    %cst_21 = arith.constant 1.000000e+00 : f32
    %25 = vector.broadcast %cst_21 : f32 to vector<8x96xf32>
    %26 = arith.addf %25, %24 : vector<8x96xf32>
    %27 = arith.divf %25, %26 : vector<8x96xf32>
    %28 = vector.extract_strided_slice %21 {offsets = [0, 96], sizes = [8, 32], strides = [1, 1]} : vector<8x128xf32> to vector<8x32xf32>
    %29 = math.tanh %28 : vector<8x32xf32>
    %30 = vector.extract_strided_slice %27 {offsets = [0, 0], sizes = [8, 32], strides = [1, 1]} : vector<8x96xf32> to vector<8x32xf32>
    %31 = vector.extract_strided_slice %27 {offsets = [0, 32], sizes = [8, 32], strides = [1, 1]} : vector<8x96xf32> to vector<8x32xf32>
    %32 = vector.extract_strided_slice %27 {offsets = [0, 64], sizes = [8, 32], strides = [1, 1]} : vector<8x96xf32> to vector<8x32xf32>
    %33 = arith.mulf %31, %18 : vector<8x32xf32>
    %34 = arith.mulf %30, %29 : vector<8x32xf32>
    %35 = arith.addf %33, %34 : vector<8x32xf32>
    %36 = math.tanh %35 : vector<8x32xf32>
    %37 = arith.mulf %32, %36 : vector<8x32xf32>
    %38 = vector.extract_strided_slice %13 {offsets = [8, 0], sizes = [8, 128], strides = [1, 1]} : vector<64x128xf32> to vector<8x128xf32>
    %cst_22 = arith.constant dense<0.000000e+00> : vector<8x128xf32>
    %39 = tpu.matmul %37, %14, %cst_22 {dimension_numbers = #tpu.dot_dimension_numbers<[1], [0], [0], [1], [0, 0, 1, 1], [], []>} : vector<8x32xf32>, vector<32x128xf32>, vector<8x128xf32> -> vector<8x128xf32>
    %40 = arith.addf %38, %39 : vector<8x128xf32>
    %41 = vector.extract_strided_slice %40 {offsets = [0, 0], sizes = [8, 96], strides = [1, 1]} : vector<8x128xf32> to vector<8x96xf32>
    %42 = arith.negf %41 : vector<8x96xf32>
    %43 = math.exp %42 : vector<8x96xf32>
    %cst_23 = arith.constant 1.000000e+00 : f32
    %44 = vector.broadcast %cst_23 : f32 to vector<8x96xf32>
    %45 = arith.addf %44, %43 : vector<8x96xf32>
    %46 = arith.divf %44, %45 : vector<8x96xf32>
    %47 = vector.extract_strided_slice %40 {offsets = [0, 96], sizes = [8, 32], strides = [1, 1]} : vector<8x128xf32> to vector<8x32xf32>
    %48 = math.tanh %47 : vector<8x32xf32>
    %49 = vector.extract_strided_slice %46 {offsets = [0, 0], sizes = [8, 32], strides = [1, 1]} : vector<8x96xf32> to vector<8x32xf32>
    %50 = vector.extract_strided_slice %46 {offsets = [0, 32], sizes = [8, 32], strides = [1, 1]} : vector<8x96xf32> to vector<8x32xf32>
    %51 = vector.extract_strided_slice %46 {offsets = [0, 64], sizes = [8, 32], strides = [1, 1]} : vector<8x96xf32> to vector<8x32xf32>
    %52 = arith.mulf %50, %35 : vector<8x32xf32>
    %53 = arith.mulf %49, %48 : vector<8x32xf32>
    %54 = arith.addf %52, %53 : vector<8x32xf32>
    %55 = math.tanh %54 : vector<8x32xf32>
    %56 = arith.mulf %51, %55 : vector<8x32xf32>
    %57 = vector.extract_strided_slice %13 {offsets = [16, 0], sizes = [8, 128], strides = [1, 1]} : vector<64x128xf32> to vector<8x128xf32>
    %cst_24 = arith.constant dense<0.000000e+00> : vector<8x128xf32>
    %58 = tpu.matmul %56, %14, %cst_24 {dimension_numbers = #tpu.dot_dimension_numbers<[1], [0], [0], [1], [0, 0, 1, 1], [], []>} : vector<8x32xf32>, vector<32x128xf32>, vector<8x128xf32> -> vector<8x128xf32>
    %59 = arith.addf %57, %58 : vector<8x128xf32>
    %60 = vector.extract_strided_slice %59 {offsets = [0, 0], sizes = [8, 96], strides = [1, 1]} : vector<8x128xf32> to vector<8x96xf32>
    %61 = arith.negf %60 : vector<8x96xf32>
    %62 = math.exp %61 : vector<8x96xf32>
    %cst_25 = arith.constant 1.000000e+00 : f32
    %63 = vector.broadcast %cst_25 : f32 to vector<8x96xf32>
    %64 = arith.addf %63, %62 : vector<8x96xf32>
    %65 = arith.divf %63, %64 : vector<8x96xf32>
    %66 = vector.extract_strided_slice %59 {offsets = [0, 96], sizes = [8, 32], strides = [1, 1]} : vector<8x128xf32> to vector<8x32xf32>
    %67 = math.tanh %66 : vector<8x32xf32>
    %68 = vector.extract_strided_slice %65 {offsets = [0, 0], sizes = [8, 32], strides = [1, 1]} : vector<8x96xf32> to vector<8x32xf32>
    %69 = vector.extract_strided_slice %65 {offsets = [0, 32], sizes = [8, 32], strides = [1, 1]} : vector<8x96xf32> to vector<8x32xf32>
    %70 = vector.extract_strided_slice %65 {offsets = [0, 64], sizes = [8, 32], strides = [1, 1]} : vector<8x96xf32> to vector<8x32xf32>
    %71 = arith.mulf %69, %54 : vector<8x32xf32>
    %72 = arith.mulf %68, %67 : vector<8x32xf32>
    %73 = arith.addf %71, %72 : vector<8x32xf32>
    %74 = math.tanh %73 : vector<8x32xf32>
    %75 = arith.mulf %70, %74 : vector<8x32xf32>
    %76 = vector.extract_strided_slice %13 {offsets = [24, 0], sizes = [8, 128], strides = [1, 1]} : vector<64x128xf32> to vector<8x128xf32>
    %cst_26 = arith.constant dense<0.000000e+00> : vector<8x128xf32>
    %77 = tpu.matmul %75, %14, %cst_26 {dimension_numbers = #tpu.dot_dimension_numbers<[1], [0], [0], [1], [0, 0, 1, 1], [], []>} : vector<8x32xf32>, vector<32x128xf32>, vector<8x128xf32> -> vector<8x128xf32>
    %78 = arith.addf %76, %77 : vector<8x128xf32>
    %79 = vector.extract_strided_slice %78 {offsets = [0, 0], sizes = [8, 96], strides = [1, 1]} : vector<8x128xf32> to vector<8x96xf32>
    %80 = arith.negf %79 : vector<8x96xf32>
    %81 = math.exp %80 : vector<8x96xf32>
    %cst_27 = arith.constant 1.000000e+00 : f32
    %82 = vector.broadcast %cst_27 : f32 to vector<8x96xf32>
    %83 = arith.addf %82, %81 : vector<8x96xf32>
    %84 = arith.divf %82, %83 : vector<8x96xf32>
    %85 = vector.extract_strided_slice %78 {offsets = [0, 96], sizes = [8, 32], strides = [1, 1]} : vector<8x128xf32> to vector<8x32xf32>
    %86 = math.tanh %85 : vector<8x32xf32>
    %87 = vector.extract_strided_slice %84 {offsets = [0, 0], sizes = [8, 32], strides = [1, 1]} : vector<8x96xf32> to vector<8x32xf32>
    %88 = vector.extract_strided_slice %84 {offsets = [0, 32], sizes = [8, 32], strides = [1, 1]} : vector<8x96xf32> to vector<8x32xf32>
    %89 = vector.extract_strided_slice %84 {offsets = [0, 64], sizes = [8, 32], strides = [1, 1]} : vector<8x96xf32> to vector<8x32xf32>
    %90 = arith.mulf %88, %73 : vector<8x32xf32>
    %91 = arith.mulf %87, %86 : vector<8x32xf32>
    %92 = arith.addf %90, %91 : vector<8x32xf32>
    %93 = math.tanh %92 : vector<8x32xf32>
    %94 = arith.mulf %89, %93 : vector<8x32xf32>
    %95 = vector.extract_strided_slice %13 {offsets = [32, 0], sizes = [8, 128], strides = [1, 1]} : vector<64x128xf32> to vector<8x128xf32>
    %cst_28 = arith.constant dense<0.000000e+00> : vector<8x128xf32>
    %96 = tpu.matmul %94, %14, %cst_28 {dimension_numbers = #tpu.dot_dimension_numbers<[1], [0], [0], [1], [0, 0, 1, 1], [], []>} : vector<8x32xf32>, vector<32x128xf32>, vector<8x128xf32> -> vector<8x128xf32>
    %97 = arith.addf %95, %96 : vector<8x128xf32>
    %98 = vector.extract_strided_slice %97 {offsets = [0, 0], sizes = [8, 96], strides = [1, 1]} : vector<8x128xf32> to vector<8x96xf32>
    %99 = arith.negf %98 : vector<8x96xf32>
    %100 = math.exp %99 : vector<8x96xf32>
    %cst_29 = arith.constant 1.000000e+00 : f32
    %101 = vector.broadcast %cst_29 : f32 to vector<8x96xf32>
    %102 = arith.addf %101, %100 : vector<8x96xf32>
    %103 = arith.divf %101, %102 : vector<8x96xf32>
    %104 = vector.extract_strided_slice %97 {offsets = [0, 96], sizes = [8, 32], strides = [1, 1]} : vector<8x128xf32> to vector<8x32xf32>
    %105 = math.tanh %104 : vector<8x32xf32>
    %106 = vector.extract_strided_slice %103 {offsets = [0, 0], sizes = [8, 32], strides = [1, 1]} : vector<8x96xf32> to vector<8x32xf32>
    %107 = vector.extract_strided_slice %103 {offsets = [0, 32], sizes = [8, 32], strides = [1, 1]} : vector<8x96xf32> to vector<8x32xf32>
    %108 = vector.extract_strided_slice %103 {offsets = [0, 64], sizes = [8, 32], strides = [1, 1]} : vector<8x96xf32> to vector<8x32xf32>
    %109 = arith.mulf %107, %92 : vector<8x32xf32>
    %110 = arith.mulf %106, %105 : vector<8x32xf32>
    %111 = arith.addf %109, %110 : vector<8x32xf32>
    %112 = math.tanh %111 : vector<8x32xf32>
    %113 = arith.mulf %108, %112 : vector<8x32xf32>
    %114 = vector.extract_strided_slice %13 {offsets = [40, 0], sizes = [8, 128], strides = [1, 1]} : vector<64x128xf32> to vector<8x128xf32>
    %cst_30 = arith.constant dense<0.000000e+00> : vector<8x128xf32>
    %115 = tpu.matmul %113, %14, %cst_30 {dimension_numbers = #tpu.dot_dimension_numbers<[1], [0], [0], [1], [0, 0, 1, 1], [], []>} : vector<8x32xf32>, vector<32x128xf32>, vector<8x128xf32> -> vector<8x128xf32>
    %116 = arith.addf %114, %115 : vector<8x128xf32>
    %117 = vector.extract_strided_slice %116 {offsets = [0, 0], sizes = [8, 96], strides = [1, 1]} : vector<8x128xf32> to vector<8x96xf32>
    %118 = arith.negf %117 : vector<8x96xf32>
    %119 = math.exp %118 : vector<8x96xf32>
    %cst_31 = arith.constant 1.000000e+00 : f32
    %120 = vector.broadcast %cst_31 : f32 to vector<8x96xf32>
    %121 = arith.addf %120, %119 : vector<8x96xf32>
    %122 = arith.divf %120, %121 : vector<8x96xf32>
    %123 = vector.extract_strided_slice %116 {offsets = [0, 96], sizes = [8, 32], strides = [1, 1]} : vector<8x128xf32> to vector<8x32xf32>
    %124 = math.tanh %123 : vector<8x32xf32>
    %125 = vector.extract_strided_slice %122 {offsets = [0, 0], sizes = [8, 32], strides = [1, 1]} : vector<8x96xf32> to vector<8x32xf32>
    %126 = vector.extract_strided_slice %122 {offsets = [0, 32], sizes = [8, 32], strides = [1, 1]} : vector<8x96xf32> to vector<8x32xf32>
    %127 = vector.extract_strided_slice %122 {offsets = [0, 64], sizes = [8, 32], strides = [1, 1]} : vector<8x96xf32> to vector<8x32xf32>
    %128 = arith.mulf %126, %111 : vector<8x32xf32>
    %129 = arith.mulf %125, %124 : vector<8x32xf32>
    %130 = arith.addf %128, %129 : vector<8x32xf32>
    %131 = math.tanh %130 : vector<8x32xf32>
    %132 = arith.mulf %127, %131 : vector<8x32xf32>
    %133 = vector.extract_strided_slice %13 {offsets = [48, 0], sizes = [8, 128], strides = [1, 1]} : vector<64x128xf32> to vector<8x128xf32>
    %cst_32 = arith.constant dense<0.000000e+00> : vector<8x128xf32>
    %134 = tpu.matmul %132, %14, %cst_32 {dimension_numbers = #tpu.dot_dimension_numbers<[1], [0], [0], [1], [0, 0, 1, 1], [], []>} : vector<8x32xf32>, vector<32x128xf32>, vector<8x128xf32> -> vector<8x128xf32>
    %135 = arith.addf %133, %134 : vector<8x128xf32>
    %136 = vector.extract_strided_slice %135 {offsets = [0, 0], sizes = [8, 96], strides = [1, 1]} : vector<8x128xf32> to vector<8x96xf32>
    %137 = arith.negf %136 : vector<8x96xf32>
    %138 = math.exp %137 : vector<8x96xf32>
    %cst_33 = arith.constant 1.000000e+00 : f32
    %139 = vector.broadcast %cst_33 : f32 to vector<8x96xf32>
    %140 = arith.addf %139, %138 : vector<8x96xf32>
    %141 = arith.divf %139, %140 : vector<8x96xf32>
    %142 = vector.extract_strided_slice %135 {offsets = [0, 96], sizes = [8, 32], strides = [1, 1]} : vector<8x128xf32> to vector<8x32xf32>
    %143 = math.tanh %142 : vector<8x32xf32>
    %144 = vector.extract_strided_slice %141 {offsets = [0, 0], sizes = [8, 32], strides = [1, 1]} : vector<8x96xf32> to vector<8x32xf32>
    %145 = vector.extract_strided_slice %141 {offsets = [0, 32], sizes = [8, 32], strides = [1, 1]} : vector<8x96xf32> to vector<8x32xf32>
    %146 = vector.extract_strided_slice %141 {offsets = [0, 64], sizes = [8, 32], strides = [1, 1]} : vector<8x96xf32> to vector<8x32xf32>
    %147 = arith.mulf %145, %130 : vector<8x32xf32>
    %148 = arith.mulf %144, %143 : vector<8x32xf32>
    %149 = arith.addf %147, %148 : vector<8x32xf32>
    %150 = math.tanh %149 : vector<8x32xf32>
    %151 = arith.mulf %146, %150 : vector<8x32xf32>
    %152 = vector.extract_strided_slice %13 {offsets = [56, 0], sizes = [8, 128], strides = [1, 1]} : vector<64x128xf32> to vector<8x128xf32>
    %cst_34 = arith.constant dense<0.000000e+00> : vector<8x128xf32>
    %153 = tpu.matmul %151, %14, %cst_34 {dimension_numbers = #tpu.dot_dimension_numbers<[1], [0], [0], [1], [0, 0, 1, 1], [], []>} : vector<8x32xf32>, vector<32x128xf32>, vector<8x128xf32> -> vector<8x128xf32>
    %154 = arith.addf %152, %153 : vector<8x128xf32>
    %155 = vector.extract_strided_slice %154 {offsets = [0, 0], sizes = [8, 96], strides = [1, 1]} : vector<8x128xf32> to vector<8x96xf32>
    %156 = arith.negf %155 : vector<8x96xf32>
    %157 = math.exp %156 : vector<8x96xf32>
    %cst_35 = arith.constant 1.000000e+00 : f32
    %158 = vector.broadcast %cst_35 : f32 to vector<8x96xf32>
    %159 = arith.addf %158, %157 : vector<8x96xf32>
    %160 = arith.divf %158, %159 : vector<8x96xf32>
    %161 = vector.extract_strided_slice %154 {offsets = [0, 96], sizes = [8, 32], strides = [1, 1]} : vector<8x128xf32> to vector<8x32xf32>
    %162 = math.tanh %161 : vector<8x32xf32>
    %163 = vector.extract_strided_slice %160 {offsets = [0, 0], sizes = [8, 32], strides = [1, 1]} : vector<8x96xf32> to vector<8x32xf32>
    %164 = vector.extract_strided_slice %160 {offsets = [0, 32], sizes = [8, 32], strides = [1, 1]} : vector<8x96xf32> to vector<8x32xf32>
    %165 = vector.extract_strided_slice %160 {offsets = [0, 64], sizes = [8, 32], strides = [1, 1]} : vector<8x96xf32> to vector<8x32xf32>
    %166 = arith.mulf %164, %149 : vector<8x32xf32>
    %167 = arith.mulf %163, %162 : vector<8x32xf32>
    %168 = arith.addf %166, %167 : vector<8x32xf32>
    %169 = math.tanh %168 : vector<8x32xf32>
    %170 = arith.mulf %165, %169 : vector<8x32xf32>
    %171 = tpu.concatenate %37, %56, %75, %94, %113, %132, %151, %170 in 0 : vector<8x32xf32>, vector<8x32xf32>, vector<8x32xf32>, vector<8x32xf32>, vector<8x32xf32>, vector<8x32xf32>, vector<8x32xf32>, vector<8x32xf32> -> vector<64x32xf32>
    %c0_36 = arith.constant 0 : index
    %c0_37 = arith.constant 0 : index
    %172 = vector.load %arg9[%c0_36, %c0_37] : memref<32x4xf32, #tpu.memory_space<vmem>>, vector<32x4xf32>
    %cst_38 = arith.constant dense<0.000000e+00> : vector<64x4xf32>
    %173 = tpu.matmul %171, %172, %cst_38 {dimension_numbers = #tpu.dot_dimension_numbers<[1], [0], [0], [1], [0, 0, 1, 1], [], []>} : vector<64x32xf32>, vector<32x4xf32>, vector<64x4xf32> -> vector<64x4xf32>
    %c0_39 = arith.constant 0 : index
    %c0_40 = arith.constant 0 : index
    %174 = vector.load %arg10[%c0_39, %c0_40] : memref<1x4xf32, #tpu.memory_space<vmem>>, vector<1x4xf32>
    %175 = vector.broadcast %174 : vector<1x4xf32> to vector<64x4xf32>
    %176 = arith.addf %173, %175 : vector<64x4xf32>
    %177 = vector.shape_cast %176 : vector<64x4xf32> to vector<8x8x4xf32>
    %c0_41 = arith.constant 0 : index
    %c0_42 = arith.constant 0 : index
    %c0_43 = arith.constant 0 : index
    %178 = vector.load %arg11[%c0_41, %c0_42, %c0_43] : memref<8x8x4xf32, #tpu.memory_space<vmem>>, vector<8x8x4xf32>
    tpu.vector_store %arg11[%c0_41, %c0_42, %c0_43], %177 {strides = array<i32>} : memref<8x8x4xf32, #tpu.memory_space<vmem>>, vector<8x8x4xf32>,
    %c0_44 = arith.constant 0 : index
    %c0_45 = arith.constant 0 : index
    %c0_46 = arith.constant 0 : index
    %179 = vector.load %arg12[%c0_44, %c0_45, %c0_46] : memref<1x8x32xf32, #tpu.memory_space<vmem>>, vector<1x8x32xf32>
    %180 = vector.shape_cast %179 : vector<1x8x32xf32> to vector<8x32xf32>
    %181 = vector.shape_cast %170 : vector<8x32xf32> to vector<1x8x32xf32>
    tpu.vector_store %arg12[%c0_44, %c0_45, %c0_46], %181 {strides = array<i32>} : memref<1x8x32xf32, #tpu.memory_space<vmem>>, vector<1x8x32xf32>,
    %c0_47 = arith.constant 0 : index
    %c0_48 = arith.constant 0 : index
    %c0_49 = arith.constant 0 : index
    %182 = vector.load %arg13[%c0_47, %c0_48, %c0_49] : memref<1x8x32xf32, #tpu.memory_space<vmem>>, vector<1x8x32xf32>
    %183 = vector.shape_cast %182 : vector<1x8x32xf32> to vector<8x32xf32>
    %184 = vector.shape_cast %168 : vector<8x32xf32> to vector<1x8x32xf32>
    tpu.vector_store %arg13[%c0_47, %c0_48, %c0_49], %184 {strides = array<i32>} : memref<1x8x32xf32, #tpu.memory_space<vmem>>, vector<1x8x32xf32>,
    return
  }
  func.func @transform_0(%arg0: i32) -> (i32, i32, i32) {
    %c0_i32 = arith.constant 0 : i32
    %c0_i32_0 = arith.constant 0 : i32
    %c0_i32_1 = arith.constant 0 : i32
    return %c0_i32, %arg0, %c0_i32_0 : i32, i32, i32
  }
  func.func @transform_1(%arg0: i32) -> (i32, i32, i32) {
    %c0_i32 = arith.constant 0 : i32
    %c0_i32_0 = arith.constant 0 : i32
    %c0_i32_1 = arith.constant 0 : i32
    return %c0_i32, %arg0, %c0_i32_0 : i32, i32, i32
  }
  func.func @transform_2(%arg0: i32) -> (i32, i32, i32) {
    %c0_i32 = arith.constant 0 : i32
    %c0_i32_0 = arith.constant 0 : i32
    %c0_i32_1 = arith.constant 0 : i32
    return %c0_i32, %arg0, %c0_i32_0 : i32, i32, i32
  }
  func.func @transform_3(%arg0: i32) -> (i32, i32) {
    %c0_i32 = arith.constant 0 : i32
    %c0_i32_0 = arith.constant 0 : i32
    %c0_i32_1 = arith.constant 0 : i32
    return %c0_i32, %c0_i32_0 : i32, i32
  }
  func.func @transform_4(%arg0: i32) -> (i32, i32) {
    %c0_i32 = arith.constant 0 : i32
    %c0_i32_0 = arith.constant 0 : i32
    %c0_i32_1 = arith.constant 0 : i32
    return %c0_i32, %c0_i32_0 : i32, i32
  }
  func.func @transform_5(%arg0: i32) -> (i32, i32) {
    %c0_i32 = arith.constant 0 : i32
    %c0_i32_0 = arith.constant 0 : i32
    %c0_i32_1 = arith.constant 0 : i32
    return %c0_i32, %c0_i32_0 : i32, i32
  }
  func.func @transform_6(%arg0: i32) -> (i32, i32) {
    %c0_i32 = arith.constant 0 : i32
    %c0_i32_0 = arith.constant 0 : i32
    %c0_i32_1 = arith.constant 0 : i32
    return %c0_i32, %c0_i32_0 : i32, i32
  }
  func.func @transform_7(%arg0: i32) -> (i32, i32) {
    %c0_i32 = arith.constant 0 : i32
    %c0_i32_0 = arith.constant 0 : i32
    %c0_i32_1 = arith.constant 0 : i32
    return %c0_i32, %c0_i32_0 : i32, i32
  }
  func.func @transform_8(%arg0: i32) -> (i32, i32) {
    %c0_i32 = arith.constant 0 : i32
    %c0_i32_0 = arith.constant 0 : i32
    %c0_i32_1 = arith.constant 0 : i32
    return %c0_i32, %c0_i32_0 : i32, i32
  }
  func.func @transform_9(%arg0: i32) -> (i32, i32) {
    %c0_i32 = arith.constant 0 : i32
    %c0_i32_0 = arith.constant 0 : i32
    %c0_i32_1 = arith.constant 0 : i32
    return %c0_i32, %c0_i32_0 : i32, i32
  }
  func.func @transform_10(%arg0: i32) -> (i32, i32, i32) {
    %c0_i32 = arith.constant 0 : i32
    %c0_i32_0 = arith.constant 0 : i32
    %c0_i32_1 = arith.constant 0 : i32
    return %c0_i32, %arg0, %c0_i32_0 : i32, i32, i32
  }
  func.func @transform_11(%arg0: i32) -> (i32, i32, i32) {
    %c0_i32 = arith.constant 0 : i32
    %c0_i32_0 = arith.constant 0 : i32
    %c0_i32_1 = arith.constant 0 : i32
    return %c0_i32, %arg0, %c0_i32_0 : i32, i32, i32
  }
  func.func @transform_12(%arg0: i32) -> (i32, i32, i32) {
    %c0_i32 = arith.constant 0 : i32
    %c0_i32_0 = arith.constant 0 : i32
    %c0_i32_1 = arith.constant 0 : i32
    return %c0_i32, %arg0, %c0_i32_0 : i32, i32, i32
  }
}

</mosaic_0001>

<llo_original>
// kernel: lstm_forward.1
$region0: #{lstm_forward.1}
  #allocation0 [shape = 'u32[]', space=smem, size = 0x4, offset = 0x4, fixed_abs, tag = 'smem constant byte address 0x4 - core index']
  #allocation1 [shape = 'u32[72,128]{1,0:T(1,128)}', space=vmem, size = 0x9000, scoped, tag = 'internal scratch']
  %s0 = inlined_call_operand.vmem [shape: f32[8,16,16], index: 0, kind: input, shape index: {}]
  %s1 = inlined_call_operand.vmem [shape: f32[1,16,32], index: 1, kind: input, shape index: {}]
  %s2 = inlined_call_operand.vmem [shape: f32[1,16,32], index: 2, kind: input, shape index: {}]
  %s3 = inlined_call_operand.vmem [shape: f32[16,32], index: 3, kind: input, shape index: {}]
  %s4 = inlined_call_operand.vmem [shape: f32[1,32], index: 4, kind: input, shape index: {}]
  %s5 = inlined_call_operand.vmem [shape: f32[32,128], index: 5, kind: input, shape index: {}]
  %s6 = inlined_call_operand.vmem [shape: f32[32,128], index: 6, kind: input, shape index: {}]
  %s7 = inlined_call_operand.vmem [shape: f32[1,128], index: 7, kind: input, shape index: {}]
  %s8 = inlined_call_operand.vmem [shape: f32[32,4], index: 8, kind: input, shape index: {}]
  %s9 = inlined_call_operand.vmem [shape: f32[1,4], index: 9, kind: input, shape index: {}]
  %s10 = inlined_call_operand.vmem [shape: f32[8,16,4], index: 10, kind: output, shape index: {0}]
  %s11 = inlined_call_operand.hbm [shape: f32[1,16,32], index: 11, kind: output, shape index: {1}]
  %s12 = inlined_call_operand.hbm [shape: f32[1,16,32], index: 12, kind: output, shape index: {2}]
  %13 = xla_tuple %s10, %s11, %s12
  %s14 = sld [smem:[#allocation0]]
  $region161: #{lstm_forward.1} parent=0
    _
  %s16 = ssub.s32 1, %s14
  %s17 = scalar_select 0, %s16, %s14
  $region1: #{lstm_forward.1} parent=0
    #allocation2 [shape = 'u8[65536]{0}', space=vmem, size = 0x10000, scoped, tag = 'input window, operand 0']
    #allocation3 [shape = 'u8[65536]{0}', space=vmem, size = 0x10000, scoped, tag = 'output window, operand 0']
    #allocation4 [shape = 'u8[8192]{0}', space=vmem, size = 0x2000, scoped, tag = 'output window, operand 1']
    #allocation5 [shape = 's32[2]{0}', space=sflag, size = 0x8, scoped, tag = 'scoped memory for lstm_forward.1']
    #allocation6 [shape = 'u8[8192]{0}', space=vmem, size = 0x2000, scoped, tag = 'output window, operand 2']
    #allocation7 [shape = 's32[2]{0}', space=sflag, size = 0x8, scoped, tag = 'scoped memory for lstm_forward.1']
    %18 = vsyncpa [#allocation5], 0
    %s19 = scalar_lea.sflag [#allocation5], 1
    %20 = vsyncpa %s19, 0
    %21 = vsyncpa [#allocation7], 0
    %s22 = scalar_lea.sflag [#allocation7], 1
    %23 = vsyncpa %s22, 0
    loop: start=0, step=1, limit=4
    $region2: #{lstm_forward.1} parent=1 // loop_pre_header
      _
    $region3: #{lstm_forward.1} parent=1 // loop_header
      %s25 = sphi 0, %s29
      %p26 = scmp.ge.s32.totalorder %s25, 4
      %s35 = sphi 0, %s37
      %s38 = sphi 0, %s35
      %s39 = sphi 0, %s38
      %s55 = sphi 0, %s39
      %s61 = sphi 0, %s63
      %s64 = sphi 0, %s61
      %s65 = sphi 0, %s64
      %s81 = sphi 0, %s65
      %s87 = sphi 0, %s89
      %s90 = sphi 0, %s87
      %s91 = sphi 0, %s90
      %s107 = sphi 0, %s91
      %s111 = sphi 0, %s111
      %s113 = sphi 0, %s111
      %s114 = sphi 0, %s113
      %s128 = sphi 0, %s114
      %s132 = sphi 0, %s132
      %s134 = sphi 0, %s132
      %s135 = sphi 0, %s134
      %s149 = sphi 0, %s135
      %s153 = sphi 0, %s153
      %s155 = sphi 0, %s153
      %s156 = sphi 0, %s155
      %s170 = sphi 0, %s156
      %s174 = sphi 0, %s174
      %s176 = sphi 0, %s174
      %s177 = sphi 0, %s176
      %s191 = sphi 0, %s177
      %s195 = sphi 0, %s195
      %s197 = sphi 0, %s195
      %s198 = sphi 0, %s197
      %s212 = sphi 0, %s198
      %s216 = sphi 0, %s216
      %s218 = sphi 0, %s216
      %s219 = sphi 0, %s218
      %s233 = sphi 0, %s219
      %s237 = sphi 0, %s237
      %s239 = sphi 0, %s237
      %s240 = sphi 0, %s239
      %s254 = sphi 0, %s240
      %s260 = sphi 0, %s262
      %s263 = sphi 0, %s260
      %s264 = sphi 0, %s263
      %s280 = sphi 0, %s264
      %s286 = sphi 0, %s288
      %s289 = sphi 0, %s286
      %s290 = sphi 0, %s289
      %s306 = sphi 0, %s290
      %s312 = sphi 0, %s314
      %s315 = sphi 0, %s312
      %s316 = sphi 0, %s315
      %s332 = sphi 0, %s316
    $region4: #{lstm_forward.1} parent=1 // loop_header_branch
      %28 = sbr.rel (%p26) target = $region8
    $region5: #{lstm_forward.1} parent=1 // loop_body
      %s30 = ssub.s32 %s25, 1
      %s31 = ssub.s32 %s25, 2
      %s32 = sadd.s32 %s25, 1
      %s33 = ssub.s32 %s25, %s32
      %p34 = scmp.eq.s32.totalorder %s33, 0
      %s36 = sadd.s32 %s35, 1
      %s37 = scalar_select %p34, %s35, %s36
      %p40 = pneg %p34
      %p41 = scmp.eq.s32.totalorder %s25, 1
      %p42 = por %p40, %p41
      %p43 = scmp.ne.s32.totalorder %s35, %s38
      %p44 = scmp.eq.s32.totalorder %s25, 0
      %p45 = por %p43, %p44
      %p46 = scmp.ne.s32.totalorder %s35, %s38
      %p47 = scmp.eq.s32.totalorder %s30, 1
      %p48 = por %p46, %p47
      %p49 = scmp.ne.s32.totalorder %s38, %s39
      %p50 = scmp.eq.s32.totalorder %s30, 0
      %p51 = por %p49, %p50
      %p52 = scmp.ne.s32.totalorder %s38, %s39
      %p53 = scmp.eq.s32.totalorder %s31, 1
      %p54 = por %p52, %p53
      %p56 = scmp.ne.s32.totalorder %s39, %s55
      %p57 = scmp.eq.s32.totalorder %s31, 0
      %p58 = por %p56, %p57
      %s59 = ssub.s32 %s25, %s32
      %p60 = scmp.eq.s32.totalorder %s59, 0
      %s62 = sadd.s32 %s61, 1
      %s63 = scalar_select %p60, %s61, %s62
      %p66 = pneg %p60
      %p67 = scmp.eq.s32.totalorder %s25, 1
      %p68 = por %p66, %p67
      %p69 = scmp.ne.s32.totalorder %s61, %s64
      %p70 = scmp.eq.s32.totalorder %s25, 0
      %p71 = por %p69, %p70
      %p72 = scmp.ne.s32.totalorder %s61, %s64
      %p73 = scmp.eq.s32.totalorder %s30, 1
      %p74 = por %p72, %p73
      %p75 = scmp.ne.s32.totalorder %s64, %s65
      %p76 = scmp.eq.s32.totalorder %s30, 0
      %p77 = por %p75, %p76
      %p78 = scmp.ne.s32.totalorder %s64, %s65
      %p79 = scmp.eq.s32.totalorder %s31, 1
      %p80 = por %p78, %p79
      %p82 = scmp.ne.s32.totalorder %s65, %s81
      %p83 = scmp.eq.s32.totalorder %s31, 0
      %p84 = por %p82, %p83
      %s85 = ssub.s32 %s25, %s32
      %p86 = scmp.eq.s32.totalorder %s85, 0
      %s88 = sadd.s32 %s87, 1
      %s89 = scalar_select %p86, %s87, %s88
      %p92 = pneg %p86
      %p93 = scmp.eq.s32.totalorder %s25, 1
      %p94 = por %p92, %p93
      %p95 = scmp.ne.s32.totalorder %s87, %s90
      %p96 = scmp.eq.s32.totalorder %s25, 0
      %p97 = por %p95, %p96
      %p98 = scmp.ne.s32.totalorder %s87, %s90
      %p99 = scmp.eq.s32.totalorder %s30, 1
      %p100 = por %p98, %p99
      %p101 = scmp.ne.s32.totalorder %s90, %s91
      %p102 = scmp.eq.s32.totalorder %s30, 0
      %p103 = por %p101, %p102
      %p104 = scmp.ne.s32.totalorder %s90, %s91
      %p105 = scmp.eq.s32.totalorder %s31, 1
      %p106 = por %p104, %p105
      %p108 = scmp.ne.s32.totalorder %s91, %s107
      %p109 = scmp.eq.s32.totalorder %s31, 0
      %p110 = por %p108, %p109
      %s112 = sadd.s32 %s111, 1
      %p115 = scmp.eq.s32.totalorder %s25, 1
      %p116 = scmp.ne.s32.totalorder %s111, %s113
      %p117 = scmp.eq.s32.totalorder %s25, 0
      %p118 = por %p116, %p117
      %p119 = scmp.ne.s32.totalorder %s111, %s113
      %p120 = scmp.eq.s32.totalorder %s30, 1
      %p121 = por %p119, %p120
      %p122 = scmp.ne.s32.totalorder %s113, %s114
      %p123 = scmp.eq.s32.totalorder %s30, 0
      %p124 = por %p122, %p123
      %p125 = scmp.ne.s32.totalorder %s113, %s114
      %p126 = scmp.eq.s32.totalorder %s31, 1
      %p127 = por %p125, %p126
      %p129 = scmp.ne.s32.totalorder %s114, %s128
      %p130 = scmp.eq.s32.totalorder %s31, 0
      %p131 = por %p129, %p130
      %s133 = sadd.s32 %s132, 1
      %p136 = scmp.eq.s32.totalorder %s25, 1
      %p137 = scmp.ne.s32.totalorder %s132, %s134
      %p138 = scmp.eq.s32.totalorder %s25, 0
      %p139 = por %p137, %p138
      %p140 = scmp.ne.s32.totalorder %s132, %s134
      %p141 = scmp.eq.s32.totalorder %s30, 1
      %p142 = por %p140, %p141
      %p143 = scmp.ne.s32.totalorder %s134, %s135
      %p144 = scmp.eq.s32.totalorder %s30, 0
      %p145 = por %p143, %p144
      %p146 = scmp.ne.s32.totalorder %s134, %s135
      %p147 = scmp.eq.s32.totalorder %s31, 1
      %p148 = por %p146, %p147
      %p150 = scmp.ne.s32.totalorder %s135, %s149
      %p151 = scmp.eq.s32.totalorder %s31, 0
      %p152 = por %p150, %p151
      %s154 = sadd.s32 %s153, 1
      %p157 = scmp.eq.s32.totalorder %s25, 1
      %p158 = scmp.ne.s32.totalorder %s153, %s155
      %p159 = scmp.eq.s32.totalorder %s25, 0
      %p160 = por %p158, %p159
      %p161 = scmp.ne.s32.totalorder %s153, %s155
      %p162 = scmp.eq.s32.totalorder %s30, 1
      %p163 = por %p161, %p162
      %p164 = scmp.ne.s32.totalorder %s155, %s156
      %p165 = scmp.eq.s32.totalorder %s30, 0
      %p166 = por %p164, %p165
      %p167 = scmp.ne.s32.totalorder %s155, %s156
      %p168 = scmp.eq.s32.totalorder %s31, 1
      %p169 = por %p167, %p168
      %p171 = scmp.ne.s32.totalorder %s156, %s170
      %p172 = scmp.eq.s32.totalorder %s31, 0
      %p173 = por %p171, %p172
      %s175 = sadd.s32 %s174, 1
      %p178 = scmp.eq.s32.totalorder %s25, 1
      %p179 = scmp.ne.s32.totalorder %s174, %s176
      %p180 = scmp.eq.s32.totalorder %s25, 0
      %p181 = por %p179, %p180
      %p182 = scmp.ne.s32.totalorder %s174, %s176
      %p183 = scmp.eq.s32.totalorder %s30, 1
      %p184 = por %p182, %p183
      %p185 = scmp.ne.s32.totalorder %s176, %s177
      %p186 = scmp.eq.s32.totalorder %s30, 0
      %p187 = por %p185, %p186
      %p188 = scmp.ne.s32.totalorder %s176, %s177
      %p189 = scmp.eq.s32.totalorder %s31, 1
      %p190 = por %p188, %p189
      %p192 = scmp.ne.s32.totalorder %s177, %s191
      %p193 = scmp.eq.s32.totalorder %s31, 0
      %p194 = por %p192, %p193
      %s196 = sadd.s32 %s195, 1
      %p199 = scmp.eq.s32.totalorder %s25, 1
      %p200 = scmp.ne.s32.totalorder %s195, %s197
      %p201 = scmp.eq.s32.totalorder %s25, 0
      %p202 = por %p200, %p201
      %p203 = scmp.ne.s32.totalorder %s195, %s197
      %p204 = scmp.eq.s32.totalorder %s30, 1
      %p205 = por %p203, %p204
      %p206 = scmp.ne.s32.totalorder %s197, %s198
      %p207 = scmp.eq.s32.totalorder %s30, 0
      %p208 = por %p206, %p207
      %p209 = scmp.ne.s32.totalorder %s197, %s198
      %p210 = scmp.eq.s32.totalorder %s31, 1
      %p211 = por %p209, %p210
      %p213 = scmp.ne.s32.totalorder %s198, %s212
      %p214 = scmp.eq.s32.totalorder %s31, 0
      %p215 = por %p213, %p214
      %s217 = sadd.s32 %s216, 1
      %p220 = scmp.eq.s32.totalorder %s25, 1
      %p221 = scmp.ne.s32.totalorder %s216, %s218
      %p222 = scmp.eq.s32.totalorder %s25, 0
      %p223 = por %p221, %p222
      %p224 = scmp.ne.s32.totalorder %s216, %s218
      %p225 = scmp.eq.s32.totalorder %s30, 1
      %p226 = por %p224, %p225
      %p227 = scmp.ne.s32.totalorder %s218, %s219
      %p228 = scmp.eq.s32.totalorder %s30, 0
      %p229 = por %p227, %p228
      %p230 = scmp.ne.s32.totalorder %s218, %s219
      %p231 = scmp.eq.s32.totalorder %s31, 1
      %p232 = por %p230, %p231
      %p234 = scmp.ne.s32.totalorder %s219, %s233
      %p235 = scmp.eq.s32.totalorder %s31, 0
      %p236 = por %p234, %p235
      %s238 = sadd.s32 %s237, 1
      %p241 = scmp.eq.s32.totalorder %s25, 1
      %p242 = scmp.ne.s32.totalorder %s237, %s239
      %p243 = scmp.eq.s32.totalorder %s25, 0
      %p244 = por %p242, %p243
      %p245 = scmp.ne.s32.totalorder %s237, %s239
      %p246 = scmp.eq.s32.totalorder %s30, 1
      %p247 = por %p245, %p246
      %p248 = scmp.ne.s32.totalorder %s239, %s240
      %p249 = scmp.eq.s32.totalorder %s30, 0
      %p250 = por %p248, %p249
      %p251 = scmp.ne.s32.totalorder %s239, %s240
      %p252 = scmp.eq.s32.totalorder %s31, 1
      %p253 = por %p251, %p252
      %p255 = scmp.ne.s32.totalorder %s240, %s254
      %p256 = scmp.eq.s32.totalorder %s31, 0
      %p257 = por %p255, %p256
      %s258 = ssub.s32 %s25, %s32
      %p259 = scmp.eq.s32.totalorder %s258, 0
      %s261 = sadd.s32 %s260, 1
      %s262 = scalar_select %p259, %s260, %s261
      %p265 = pneg %p259
      %p266 = scmp.eq.s32.totalorder %s25, 1
      %p267 = por %p265, %p266
      %p268 = scmp.ne.s32.totalorder %s260, %s263
      %p269 = scmp.eq.s32.totalorder %s25, 0
      %p270 = por %p268, %p269
      %p271 = scmp.ne.s32.totalorder %s260, %s263
      %p272 = scmp.eq.s32.totalorder %s30, 1
      %p273 = por %p271, %p272
      %p274 = scmp.ne.s32.totalorder %s263, %s264
      %p275 = scmp.eq.s32.totalorder %s30, 0
      %p276 = por %p274, %p275
      %p277 = scmp.ne.s32.totalorder %s263, %s264
      %p278 = scmp.eq.s32.totalorder %s31, 1
      %p279 = por %p277, %p278
      %p281 = scmp.ne.s32.totalorder %s264, %s280
      %p282 = scmp.eq.s32.totalorder %s31, 0
      %p283 = por %p281, %p282
      %s284 = ssub.s32 %s25, %s32
      %p285 = scmp.eq.s32.totalorder %s284, 0
      %s287 = sadd.s32 %s286, 1
      %s288 = scalar_select %p285, %s286, %s287
      %p291 = pneg %p285
      %p292 = scmp.eq.s32.totalorder %s25, 1
      %p293 = por %p291, %p292
      %p294 = scmp.ne.s32.totalorder %s286, %s289
      %p295 = scmp.eq.s32.totalorder %s25, 0
      %p296 = por %p294, %p295
      %p297 = scmp.ne.s32.totalorder %s286, %s289
      %p298 = scmp.eq.s32.totalorder %s30, 1
      %p299 = por %p297, %p298
      %p300 = scmp.ne.s32.totalorder %s289, %s290
      %p301 = scmp.eq.s32.totalorder %s30, 0
      %p302 = por %p300, %p301
      %p303 = scmp.ne.s32.totalorder %s289, %s290
      %p304 = scmp.eq.s32.totalorder %s31, 1
      %p305 = por %p303, %p304
      %p307 = scmp.ne.s32.totalorder %s290, %s306
      %p308 = scmp.eq.s32.totalorder %s31, 0
      %p309 = por %p307, %p308
      %s310 = ssub.s32 %s25, %s32
      %p311 = scmp.eq.s32.totalorder %s310, 0
      %s313 = sadd.s32 %s312, 1
      %s314 = scalar_select %p311, %s312, %s313
      %p317 = pneg %p311
      %p318 = scmp.eq.s32.totalorder %s25, 1
      %p319 = por %p317, %p318
      %p320 = scmp.ne.s32.totalorder %s312, %s315
      %p321 = scmp.eq.s32.totalorder %s25, 0
      %p322 = por %p320, %p321
      %p323 = scmp.ne.s32.totalorder %s312, %s315
      %p324 = scmp.eq.s32.totalorder %s30, 1
      %p325 = por %p323, %p324
      %p326 = scmp.ne.s32.totalorder %s315, %s316
      %p327 = scmp.eq.s32.totalorder %s30, 0
      %p328 = por %p326, %p327
      %p329 = scmp.ne.s32.totalorder %s315, %s316
      %p330 = scmp.eq.s32.totalorder %s31, 1
      %p331 = por %p329, %p330
      %p333 = scmp.ne.s32.totalorder %s316, %s332
      %p334 = scmp.eq.s32.totalorder %s31, 0
      %p335 = por %p333, %p334
      %p336 = scmp.le.s32.totalorder 1, %s25
      %p337 = scmp.lt.s32.totalorder %s25, 3
      %p338 = pnand %p336, %p337
      %p339 = pneg %p338
      // Predicated region
      $region9: #{lstm_forward.1} parent=5 // pred_check
        _
      $region10: #{lstm_forward.1} parent=5 // pred_check_branch
        %341 = sbr.rel (%p338) target = $region12
      $region11: #{lstm_forward.1} parent=5 // pred_region
        %s342 = ssub.s32 %s25, 1
        // Predicated region
        $region13: #{lstm_forward.1} parent=11 // pred_check
          %p343 = pneg %p124
        $region14: #{lstm_forward.1} parent=11 // pred_check_branch
          %345 = sbr.rel (%p343) target = $region16
        $region15: #{lstm_forward.1} parent=11 // pred_region
          _
        $region16: #{lstm_forward.1} parent=11 // pred_fallthru
          _
        // Predicated region
        $region17: #{lstm_forward.1} parent=11 // pred_check
          %p346 = pneg %p145
        $region18: #{lstm_forward.1} parent=11 // pred_check_branch
          %348 = sbr.rel (%p346) target = $region20
        $region19: #{lstm_forward.1} parent=11 // pred_region
          _
        $region20: #{lstm_forward.1} parent=11 // pred_fallthru
          _
        // Predicated region
        $region21: #{lstm_forward.1} parent=11 // pred_check
          %p349 = pneg %p166
        $region22: #{lstm_forward.1} parent=11 // pred_check_branch
          %351 = sbr.rel (%p349) target = $region24
        $region23: #{lstm_forward.1} parent=11 // pred_region
          _
        $region24: #{lstm_forward.1} parent=11 // pred_fallthru
          _
        // Predicated region
        $region25: #{lstm_forward.1} parent=11 // pred_check
          %p352 = pneg %p187
        $region26: #{lstm_forward.1} parent=11 // pred_check_branch
          %354 = sbr.rel (%p352) target = $region28
        $region27: #{lstm_forward.1} parent=11 // pred_region
          _
        $region28: #{lstm_forward.1} parent=11 // pred_fallthru
          _
        // Predicated region
        $region29: #{lstm_forward.1} parent=11 // pred_check
          %p355 = pneg %p208
        $region30: #{lstm_forward.1} parent=11 // pred_check_branch
          %357 = sbr.rel (%p355) target = $region32
        $region31: #{lstm_forward.1} parent=11 // pred_region
          _
        $region32: #{lstm_forward.1} parent=11 // pred_fallthru
          _
        // Predicated region
        $region33: #{lstm_forward.1} parent=11 // pred_check
          %p358 = pneg %p229
        $region34: #{lstm_forward.1} parent=11 // pred_check_branch
          %360 = sbr.rel (%p358) target = $region36
        $region35: #{lstm_forward.1} parent=11 // pred_region
          _
        $region36: #{lstm_forward.1} parent=11 // pred_fallthru
          _
        // Predicated region
        $region37: #{lstm_forward.1} parent=11 // pred_check
          %p361 = pneg %p250
        $region38: #{lstm_forward.1} parent=11 // pred_check_branch
          %363 = sbr.rel (%p361) target = $region40
        $region39: #{lstm_forward.1} parent=11 // pred_region
          _
        $region40: #{lstm_forward.1} parent=11 // pred_fallthru
          _
      $region12: #{lstm_forward.1} parent=5 // pred_fallthru
        _
      %p364 = scmp.lt.s32.totalorder %s25, 2
      // Predicated region
      $region41: #{lstm_forward.1} parent=5 // pred_check
        %p365 = pneg %p364
      $region42: #{lstm_forward.1} parent=5 // pred_check_branch
        %367 = sbr.rel (%p365) target = $region44
      $region43: #{lstm_forward.1} parent=5 // pred_region
        // Predicated region
        $region45: #{lstm_forward.1} parent=43 // pred_check
          %p368 = pneg %p45
        $region46: #{lstm_forward.1} parent=43 // pred_check_branch
          %370 = sbr.rel (%p368) target = $region48
        $region47: #{lstm_forward.1} parent=43 // pred_region
          %s371 = sand.u32 %s35, 1
          %s372 = sand.u32 %s35, 1
          %s373 = smul.addr %s372, 64
          %s374 = scalar_lea.vmem [#allocation2], %s373
          %s375 = smul.addr %s25, 8
          %s376 = scalar_lea.vmem %s0, %s375
          // Predicated region
          $region49: #{lstm_forward.1} parent=47 // pred_check
            _
          $region50: #{lstm_forward.1} parent=47 // pred_check_branch
            %378 = sbr.rel (0) target = $region52
          $region51: #{lstm_forward.1} parent=47 // pred_region
            // Predicated region
            $region53: #{lstm_forward.1} parent=51 // pred_check
              _
            $region54: #{lstm_forward.1} parent=51 // pred_check_branch
              %380 = sbr.rel (0) target = $region56
            $region55: #{lstm_forward.1} parent=51 // pred_region
              // Predicated region
              $region68: #{lstm_forward.1} parent=55 // pred_check
                _
              $region69: #{lstm_forward.1} parent=55 // pred_check_branch
                %410 = sbr.rel (0) target = $region71
              $region70: #{lstm_forward.1} parent=55 // pred_region
                loop: start=0, step=1, limit=1
                $region72: #{lstm_forward.1} parent=70 // loop_pre_header
                  _
                $region73: #{lstm_forward.1} parent=70 // loop_header
                  %s412 = sphi 0, %s416
                  %p413 = scmp.ge.s32.totalorder %s412, 1
                  %s417 = sphi %s376, %s376
                  %s418 = sphi %s374, %s374
                $region74: #{lstm_forward.1} parent=70 // loop_header_branch
                  %415 = sbr.rel (%p413) target = $region78
                $region75: #{lstm_forward.1} parent=70 // loop_body
                  %v419 = vld [vmem:[%s417] sm:$0xff]
                  %420 = vst [vmem:[%s418] sm:$0xff] %v419
                  %v421 = vld [vmem:[%s417 + $0x10] sm:$0xff]
                  %422 = vst [vmem:[%s418 + $0x8] sm:$0xff] %v421
                  %v423 = vld [vmem:[%s417 + $0x20] sm:$0xff]
                  %424 = vst [vmem:[%s418 + $0x10] sm:$0xff] %v423
                  %v425 = vld [vmem:[%s417 + $0x30] sm:$0xff]
                  %426 = vst [vmem:[%s418 + $0x18] sm:$0xff] %v425
                  %v427 = vld [vmem:[%s417 + $0x40] sm:$0xff]
                  %428 = vst [vmem:[%s418 + $0x20] sm:$0xff] %v427
                  %v429 = vld [vmem:[%s417 + $0x50] sm:$0xff]
                  %430 = vst [vmem:[%s418 + $0x28] sm:$0xff] %v429
                  %v431 = vld [vmem:[%s417 + $0x60] sm:$0xff]
                  %432 = vst [vmem:[%s418 + $0x30] sm:$0xff] %v431
                  %v433 = vld [vmem:[%s417 + $0x70] sm:$0xff]
                  %434 = vst [vmem:[%s418 + $0x38] sm:$0xff] %v433
                $region76: #{lstm_forward.1} parent=70 // loop_footer
                  %s416 = sadd.s32 1, %s412
                $region77: #{lstm_forward.1} parent=70 // loop_footer_branch
                  %411 = sbr.rel target = $region73
                $region78: #{lstm_forward.1} parent=70 // loop_exit
                  _
              $region71: #{lstm_forward.1} parent=55 // pred_fallthru
                _
              // Predicated region
              $region79: #{lstm_forward.1} parent=55 // pred_check
                _
              $region80: #{lstm_forward.1} parent=55 // pred_check_branch
                %436 = sbr.rel target = $region82
              $region81: #{lstm_forward.1} parent=55 // pred_region
                _
              $region82: #{lstm_forward.1} parent=55 // pred_fallthru
                _
            $region56: #{lstm_forward.1} parent=51 // pred_fallthru
              _
            // Predicated region
            $region57: #{lstm_forward.1} parent=51 // pred_check
              _
            $region58: #{lstm_forward.1} parent=51 // pred_check_branch
              %382 = sbr.rel target = $region60
            $region59: #{lstm_forward.1} parent=51 // pred_region
              %s384 = ssub.s32 256, 1
              loop: start=0, step=1, limit=1
              $region61: #{lstm_forward.1} parent=59 // loop_pre_header
                _
              $region62: #{lstm_forward.1} parent=59 // loop_header
                %s386 = sphi 0, %s390
                %p387 = scmp.ge.s32.totalorder %s386, 1
                %s391 = sphi %s376, %s376
                %s392 = sphi %s374, %s374
              $region63: #{lstm_forward.1} parent=59 // loop_header_branch
                %389 = sbr.rel (%p387) target = $region67
              $region64: #{lstm_forward.1} parent=59 // loop_body
                %v393 = vld [vmem:[%s391] sm:%s384]
                %394 = vst [vmem:[%s392] sm:%s384] %v393
                %v395 = vld [vmem:[%s391 + $0x10] sm:%s384]
                %396 = vst [vmem:[%s392 + $0x8] sm:%s384] %v395
                %v397 = vld [vmem:[%s391 + $0x20] sm:%s384]
                %398 = vst [vmem:[%s392 + $0x10] sm:%s384] %v397
                %v399 = vld [vmem:[%s391 + $0x30] sm:%s384]
                %400 = vst [vmem:[%s392 + $0x18] sm:%s384] %v399
                %v401 = vld [vmem:[%s391 + $0x40] sm:%s384]
                %402 = vst [vmem:[%s392 + $0x20] sm:%s384] %v401
                %v403 = vld [vmem:[%s391 + $0x50] sm:%s384]
                %404 = vst [vmem:[%s392 + $0x28] sm:%s384] %v403
                %v405 = vld [vmem:[%s391 + $0x60] sm:%s384]
                %406 = vst [vmem:[%s392 + $0x30] sm:%s384] %v405
                %v407 = vld [vmem:[%s391 + $0x70] sm:%s384]
                %408 = vst [vmem:[%s392 + $0x38] sm:%s384] %v407
              $region65: #{lstm_forward.1} parent=59 // loop_footer
                %s390 = sadd.s32 1, %s386
              $region66: #{lstm_forward.1} parent=59 // loop_footer_branch
                %385 = sbr.rel target = $region62
              $region67: #{lstm_forward.1} parent=59 // loop_exit
                _
            $region60: #{lstm_forward.1} parent=51 // pred_fallthru
              _
          $region52: #{lstm_forward.1} parent=47 // pred_fallthru
            _
          %437 = vnop
        $region48: #{lstm_forward.1} parent=43 // pred_fallthru
          _
        // Predicated region
        $region83: #{lstm_forward.1} parent=43 // pred_check
          %p438 = pneg %p71
        $region84: #{lstm_forward.1} parent=43 // pred_check_branch
          %440 = sbr.rel (%p438) target = $region86
        $region85: #{lstm_forward.1} parent=43 // pred_region
          %p441 = scmp.lt.s32.totalorder %s25, 1
          %s442 = scalar_select %p441, %s25, 1
          %s443 = smul.addr %s442, 8
          %s444 = scalar_lea.vmem %s1, %s443
        $region86: #{lstm_forward.1} parent=43 // pred_fallthru
          _
        // Predicated region
        $region87: #{lstm_forward.1} parent=43 // pred_check
          %p445 = pneg %p97
        $region88: #{lstm_forward.1} parent=43 // pred_check_branch
          %447 = sbr.rel (%p445) target = $region90
        $region89: #{lstm_forward.1} parent=43 // pred_region
          %p448 = scmp.lt.s32.totalorder %s25, 1
          %s449 = scalar_select %p448, %s25, 1
          %s450 = smul.addr %s449, 8
          %s451 = scalar_lea.vmem %s2, %s450
        $region90: #{lstm_forward.1} parent=43 // pred_fallthru
          _
      $region44: #{lstm_forward.1} parent=5 // pred_fallthru
        _
      %p452 = scmp.le.s32.totalorder 1, %s25
      %p453 = scmp.lt.s32.totalorder %s25, 3
      %p454 = pnand %p452, %p453
      %p455 = pneg %p454
      // Predicated region
      $region91: #{lstm_forward.1} parent=5 // pred_check
        _
      $region92: #{lstm_forward.1} parent=5 // pred_check_branch
        %457 = sbr.rel (%p454) target = $region94
      $region93: #{lstm_forward.1} parent=5 // pred_region
        %s458 = ssub.s32 %s25, 1
        %s459 = sand.u32 %s38, 1
        %s460 = sand.u32 %s38, 1
        %s461 = smul.addr %s460, 64
        %s462 = scalar_lea.vmem [#allocation2], %s461
        // Predicated region
        $region95: #{lstm_forward.1} parent=93 // pred_check
          %p463 = pneg %p51
        $region96: #{lstm_forward.1} parent=93 // pred_check_branch
          %465 = sbr.rel (%p463) target = $region98
        $region97: #{lstm_forward.1} parent=93 // pred_region
          _
        $region98: #{lstm_forward.1} parent=93 // pred_fallthru
          _
        %s466 = sand.u32 %s38, 1
        %s467 = sand.u32 %s38, 1
        %s468 = smul.addr %s467, 64
        %s469 = scalar_lea.vmem [#allocation2], %s468
        %p470 = pneg %p51
        %p471 = pneg %p48
        %p472 = scmp.lt.s32.totalorder %s30, 1
        %s473 = scalar_select %p472, %s30, 1
        %s474 = smul.addr %s473, 8
        %s475 = scalar_lea.vmem %s1, %s474
        %p476 = pneg %p77
        %p477 = pneg %p74
        %p478 = scmp.lt.s32.totalorder %s30, 1
        %s479 = scalar_select %p478, %s30, 1
        %s480 = smul.addr %s479, 8
        %s481 = scalar_lea.vmem %s2, %s480
        %p482 = pneg %p103
        %p483 = pneg %p100
        %p484 = pneg %p124
        %p485 = pneg %p121
        %p486 = pneg %p145
        %p487 = pneg %p142
        %p488 = pneg %p166
        %p489 = pneg %p163
        %p490 = pneg %p187
        %p491 = pneg %p184
        %p492 = pneg %p208
        %p493 = pneg %p205
        %p494 = pneg %p229
        %p495 = pneg %p226
        %p496 = pneg %p250
        %p497 = pneg %p247
        %p498 = pneg %p276
        %p499 = pneg %p273
        %s500 = sand.u32 %s263, 1
        %s501 = sand.u32 %s263, 1
        %s502 = smul.addr %s501, 64
        %s503 = scalar_lea.vmem [#allocation3], %s502
        %p504 = pneg %p302
        %p505 = pneg %p299
        %s506 = sand.u32 %s289, 1
        %s507 = scalar_lea.sflag [#allocation5], %s506
        %s508 = sand.u32 %s289, 1
        %s509 = smul.addr %s508, 8
        %s510 = scalar_lea.vmem [#allocation4], %s509
        %p511 = pneg %p328
        %p512 = pneg %p325
        %s513 = sand.u32 %s315, 1
        %s514 = scalar_lea.sflag [#allocation7], %s513
        %s515 = sand.u32 %s315, 1
        %s516 = smul.addr %s515, 8
        %s517 = scalar_lea.vmem [#allocation6], %s516
        %p518 = scmp.lt.s32.totalorder %s30, 1
        %s519 = scalar_select %p518, %s30, 1
        %s520 = smul.addr %s519, 8
        %s521 = scalar_lea.vmem %s1, %s520
        %p522 = scmp.lt.s32.totalorder %s30, 1
        %s523 = scalar_select %p522, %s30, 1
        %s524 = smul.addr %s523, 8
        %s525 = scalar_lea.vmem %s2, %s524
        %v526 = vld [vmem:[%s462] sm:$0xff]
        %v527 = vld [vmem:[%s462 + $0x8] sm:$0xff]
        %v528 = vld [vmem:[%s462 + $0x10] sm:$0xff]
        %v529 = vld [vmem:[%s462 + $0x18] sm:$0xff]
        %v530 = vld [vmem:[%s462 + $0x20] sm:$0xff]
        %v531 = vld [vmem:[%s462 + $0x28] sm:$0xff]
        %v532 = vld [vmem:[%s462 + $0x30] sm:$0xff]
        %v533 = vld [vmem:[%s462 + $0x38] sm:$0xff]
        %v534 = vld [vmem:[%s3] sm:$0xff]
        %v535 = vld [vmem:[%s3 + $0x8] sm:$0xff]
        %v536 = vld [vmem:[%s4] sm:$0x1]
        %v538 = vperm.slane %v536, 0
        %vm540 = vcmask 130048
        %v542 = vsel %vm540, %v526, 0
        %v545 = vsel %vm540, %v527, 0
        %v548 = vsel %vm540, %v528, 0
        %v551 = vsel %vm540, %v529, 0
        %v554 = vsel %vm540, %v530, 0
        %v557 = vsel %vm540, %v531, 0
        %v560 = vsel %vm540, %v532, 0
        %v563 = vsel %vm540, %v533, 0
        %565 = vmatpush.msra.mxu0 0.0
        %566 = vmatpush.msra.mxu0 0.0
        %567 = vmatpush.msra.mxu0 0.0
        %568 = vmatpush.msra.mxu0 0.0
        %569 = vmatpush.msra.mxu0 0.0
        %570 = vmatpush.msra.mxu0 0.0
        %571 = vmatpush.msra.mxu0 0.0
        %572 = vmatpush.msra.mxu0 0.0
        %573 = vmatpush.msra.mxu0 0.0
        %574 = vmatpush.msra.mxu0 0.0
        %575 = vmatpush.msra.mxu0 0.0
        %576 = vmatpush.msra.mxu0 0.0
        %577 = vmatpush.msra.mxu0 0.0
        %578 = vmatpush.msra.mxu0 0.0
        %579 = vmatpush.msra.mxu0 %v535
        %580 = vmatpush.msra.mxu0 %v534
        %581 = vmatmul.f32.gmra.mxu0 %v542
        %v582 = vpop.f32.mrf.mxu0
        %v583 = vadd.f32 %v538, %v582
        %584 = vmatmul.f32.gmra.mxu0 %v545
        %v585 = vpop.f32.mrf.mxu0
        %v586 = vadd.f32 %v538, %v585
        %587 = vmatmul.f32.gmra.mxu0 %v548
        %v588 = vpop.f32.mrf.mxu0
        %v589 = vadd.f32 %v538, %v588
        %590 = vmatmul.f32.gmra.mxu0 %v551
        %v591 = vpop.f32.mrf.mxu0
        %v592 = vadd.f32 %v538, %v591
        %593 = vmatmul.f32.gmra.mxu0 %v554
        %v594 = vpop.f32.mrf.mxu0
        %v595 = vadd.f32 %v538, %v594
        %596 = vmatmul.f32.gmra.mxu0 %v557
        %v597 = vpop.f32.mrf.mxu0
        %v598 = vadd.f32 %v538, %v597
        %599 = vmatmul.f32.gmra.mxu0 %v560
        %v600 = vpop.f32.mrf.mxu0
        %v601 = vadd.f32 %v538, %v600
        %602 = vmatmul.f32.gmra.mxu0 %v563
        %v603 = vpop.f32.mrf.mxu0
        %v604 = vadd.f32 %v538, %v603
        %605 = vdwg.mxu0
        %v606 = vmax.f32 %v583, 0.0
        %v607 = vmax.f32 %v586, 0.0
        %v608 = vmax.f32 %v589, 0.0
        %v609 = vmax.f32 %v592, 0.0
        %v610 = vmax.f32 %v595, 0.0
        %v611 = vmax.f32 %v598, 0.0
        %v612 = vmax.f32 %v601, 0.0
        %v613 = vmax.f32 %v604, 0.0
        %v614 = vld [vmem:[%s5] sm:$0xff]
        %v615 = vld [vmem:[%s5 + $0x8] sm:$0xff]
        %v616 = vld [vmem:[%s5 + $0x10] sm:$0xff]
        %v617 = vld [vmem:[%s5 + $0x18] sm:$0xff]
        %v618 = vld [vmem:[%s7] sm:$0x1]
        %v620 = vperm.slane %v618, 0
        %vm622 = vcmask 261120
        %v624 = vsel %vm622, %v606, 0
        %v627 = vsel %vm622, %v607, 0
        %v630 = vsel %vm622, %v608, 0
        %v633 = vsel %vm622, %v609, 0
        %v636 = vsel %vm622, %v610, 0
        %v639 = vsel %vm622, %v611, 0
        %v642 = vsel %vm622, %v612, 0
        %v645 = vsel %vm622, %v613, 0
        %647 = vmatpush.msra.mxu0 0.0
        %648 = vmatpush.msra.mxu0 0.0
        %649 = vmatpush.msra.mxu0 0.0
        %650 = vmatpush.msra.mxu0 0.0
        %651 = vmatpush.msra.mxu0 0.0
        %652 = vmatpush.msra.mxu0 0.0
        %653 = vmatpush.msra.mxu0 0.0
        %654 = vmatpush.msra.mxu0 0.0
        %655 = vmatpush.msra.mxu0 0.0
        %656 = vmatpush.msra.mxu0 0.0
        %657 = vmatpush.msra.mxu0 0.0
        %658 = vmatpush.msra.mxu0 0.0
        %659 = vmatpush.msra.mxu0 %v617
        %660 = vmatpush.msra.mxu0 %v616
        %661 = vmatpush.msra.mxu0 %v615
        %662 = vmatpush.msra.mxu0 %v614
        %663 = vmatmul.f32.gmra.mxu0 %v624
        %v664 = vpop.f32.mrf.mxu0
        %v665 = vadd.f32 %v620, %v664
        %666 = vmatmul.f32.gmra.mxu0 %v627
        %v667 = vpop.f32.mrf.mxu0
        %v668 = vadd.f32 %v620, %v667
        %669 = vmatmul.f32.gmra.mxu0 %v630
        %v670 = vpop.f32.mrf.mxu0
        %v671 = vadd.f32 %v620, %v670
        %672 = vmatmul.f32.gmra.mxu0 %v633
        %v673 = vpop.f32.mrf.mxu0
        %v674 = vadd.f32 %v620, %v673
        %675 = vmatmul.f32.gmra.mxu0 %v636
        %v676 = vpop.f32.mrf.mxu0
        %v677 = vadd.f32 %v620, %v676
        %678 = vmatmul.f32.gmra.mxu0 %v639
        %v679 = vpop.f32.mrf.mxu0
        %v680 = vadd.f32 %v620, %v679
        %681 = vmatmul.f32.gmra.mxu0 %v642
        %v682 = vpop.f32.mrf.mxu0
        %v683 = vadd.f32 %v620, %v682
        %684 = vmatmul.f32.gmra.mxu0 %v645
        %v685 = vpop.f32.mrf.mxu0
        %v686 = vadd.f32 %v620, %v685
        %687 = vdwg.mxu0
        %v688 = vld [vmem:[%s6] sm:$0xff]
        %v689 = vld [vmem:[%s6 + $0x8] sm:$0xff]
        %v690 = vld [vmem:[%s6 + $0x10] sm:$0xff]
        %v691 = vld [vmem:[%s6 + $0x18] sm:$0xff]
        %v692 = vld [vmem:[%s521] sm:$0xff]
        %v693 = vld [vmem:[%s525] sm:$0xff]
        %v695 = vsel %vm622, %v692, 0
        %697 = vmatpush.msra.mxu0 0.0
        %698 = vmatpush.msra.mxu0 0.0
        %699 = vmatpush.msra.mxu0 0.0
        %700 = vmatpush.msra.mxu0 0.0
        %701 = vmatpush.msra.mxu0 0.0
        %702 = vmatpush.msra.mxu0 0.0
        %703 = vmatpush.msra.mxu0 0.0
        %704 = vmatpush.msra.mxu0 0.0
        %705 = vmatpush.msra.mxu0 0.0
        %706 = vmatpush.msra.mxu0 0.0
        %707 = vmatpush.msra.mxu0 0.0
        %708 = vmatpush.msra.mxu0 0.0
        %709 = vmatpush.msra.mxu0 %v691
        %710 = vmatpush.msra.mxu0 %v690
        %711 = vmatpush.msra.mxu0 %v689
        %712 = vmatpush.msra.mxu0 %v688
        %713 = vmatmul.f32.gmra.mxu0 %v695
        %v714 = vpop.f32.mrf.mxu0
        %v715 = vadd.f32 0.0, %v714
        %716 = vdwg.mxu0
        %v717 = vadd.f32 %v665, %v715
        %v718 = vxor.u32 %v717, 2147483648
        %v719 = vmul.f32 %v718, 1.442695
        %v720 = vpow.pop %v719
        %v721 = vadd.f32 %v720, 1.0
        %v722 = vrcp.pop %v721
        %v723 = vmul.f32 %v721, %v722
        %v724 = vsub.f32 1.0, %v723
        %v725 = vmul.f32 %v722, %v724
        %v726 = vadd.f32 %v722, %v725
        %vm727 = vweird.f32 %v721
        %vm728 = vweird.f32 %v722
        %vm729 = vmor %vm727, %vm728
        %v730 = vsel %vm729, %v722, %v726
        %v731 = vand.u32 2147483647, %v721
        %vm732 = vcmp.eq.f32.partialorder %v731, 8.507059e+37
        %v733 = vand.u32 %v721, 2147483648
        %v734 = vor.u32 1.1754944e-38, %v733
        %v735 = vsel %vm732, %v734, %v730
        %v736 = vmul.f32 1.0, %v735
        %v737 = vtanh.pop %v717
        %739 = vrot.lane.b32.xlu0 %v693, 32
        %v740 = vpop.permute.xlu0 %739
        %v742 = vmul.f32 %v736, %v740
        %744 = vrot.lane.b32.xlu0 %v737, 32
        %v745 = vpop.permute.xlu0 %744
        %v747 = vmul.f32 %v736, %v745
        %749 = vrot.lane.b32.xlu0 %v747, 32
        %v750 = vpop.permute.xlu0 %749
        %v752 = vadd.f32 %v742, %v750
        %v753 = vtanh.pop %v752
        %755 = vrot.lane.b32.xlu0 %v753, 32
        %v756 = vpop.permute.xlu0 %755
        %v758 = vmul.f32 %v736, %v756
        %760 = vrot.lane.b32.xlu0 %v758, 64
        %v761 = vpop.permute.xlu0 %760
        %v762 = vsel %vm622, %v761, 0
        %764 = vmatpush.msra.mxu0 0.0
        %765 = vmatpush.msra.mxu0 0.0
        %766 = vmatpush.msra.mxu0 0.0
        %767 = vmatpush.msra.mxu0 0.0
        %768 = vmatpush.msra.mxu0 0.0
        %769 = vmatpush.msra.mxu0 0.0
        %770 = vmatpush.msra.mxu0 0.0
        %771 = vmatpush.msra.mxu0 0.0
        %772 = vmatpush.msra.mxu0 0.0
        %773 = vmatpush.msra.mxu0 0.0
        %774 = vmatpush.msra.mxu0 0.0
        %775 = vmatpush.msra.mxu0 0.0
        %776 = vmatpush.msra.mxu0 %v691
        %777 = vmatpush.msra.mxu0 %v690
        %778 = vmatpush.msra.mxu0 %v689
        %779 = vmatpush.msra.mxu0 %v688
        %780 = vmatmul.f32.gmra.mxu0 %v762
        %v781 = vpop.f32.mrf.mxu0
        %v782 = vadd.f32 0.0, %v781
        %783 = vdwg.mxu0
        %v784 = vadd.f32 %v668, %v782
        %v785 = vxor.u32 %v784, 2147483648
        %v786 = vmul.f32 %v785, 1.442695
        %v787 = vpow.pop %v786
        %v788 = vadd.f32 %v787, 1.0
        %v789 = vrcp.pop %v788
        %v790 = vmul.f32 %v788, %v789
        %v791 = vsub.f32 1.0, %v790
        %v792 = vmul.f32 %v789, %v791
        %v793 = vadd.f32 %v789, %v792
        %vm794 = vweird.f32 %v788
        %vm795 = vweird.f32 %v789
        %vm796 = vmor %vm794, %vm795
        %v797 = vsel %vm796, %v789, %v793
        %v798 = vand.u32 2147483647, %v788
        %vm799 = vcmp.eq.f32.partialorder %v798, 8.507059e+37
        %v800 = vand.u32 %v788, 2147483648
        %v801 = vor.u32 1.1754944e-38, %v800
        %v802 = vsel %vm799, %v801, %v797
        %v803 = vmul.f32 1.0, %v802
        %v804 = vtanh.pop %v784
        %v805 = vmul.f32 %v803, %v752
        %807 = vrot.lane.b32.xlu0 %v804, 32
        %v808 = vpop.permute.xlu0 %807
        %v810 = vmul.f32 %v803, %v808
        %812 = vrot.lane.b32.xlu0 %v810, 32
        %v813 = vpop.permute.xlu0 %812
        %v815 = vadd.f32 %v805, %v813
        %v816 = vtanh.pop %v815
        %818 = vrot.lane.b32.xlu0 %v816, 32
        %v819 = vpop.permute.xlu0 %818
        %v821 = vmul.f32 %v803, %v819
        %823 = vrot.lane.b32.xlu0 %v821, 64
        %v824 = vpop.permute.xlu0 %823
        %v825 = vsel %vm622, %v824, 0
        %827 = vmatpush.msra.mxu0 0.0
        %828 = vmatpush.msra.mxu0 0.0
        %829 = vmatpush.msra.mxu0 0.0
        %830 = vmatpush.msra.mxu0 0.0
        %831 = vmatpush.msra.mxu0 0.0
        %832 = vmatpush.msra.mxu0 0.0
        %833 = vmatpush.msra.mxu0 0.0
        %834 = vmatpush.msra.mxu0 0.0
        %835 = vmatpush.msra.mxu0 0.0
        %836 = vmatpush.msra.mxu0 0.0
        %837 = vmatpush.msra.mxu0 0.0
        %838 = vmatpush.msra.mxu0 0.0
        %839 = vmatpush.msra.mxu0 %v691
        %840 = vmatpush.msra.mxu0 %v690
        %841 = vmatpush.msra.mxu0 %v689
        %842 = vmatpush.msra.mxu0 %v688
        %843 = vmatmul.f32.gmra.mxu0 %v825
        %v844 = vpop.f32.mrf.mxu0
        %v845 = vadd.f32 0.0, %v844
        %846 = vdwg.mxu0
        %v847 = vadd.f32 %v671, %v845
        %v848 = vxor.u32 %v847, 2147483648
        %v849 = vmul.f32 %v848, 1.442695
        %v850 = vpow.pop %v849
        %v851 = vadd.f32 %v850, 1.0
        %v852 = vrcp.pop %v851
        %v853 = vmul.f32 %v851, %v852
        %v854 = vsub.f32 1.0, %v853
        %v855 = vmul.f32 %v852, %v854
        %v856 = vadd.f32 %v852, %v855
        %vm857 = vweird.f32 %v851
        %vm858 = vweird.f32 %v852
        %vm859 = vmor %vm857, %vm858
        %v860 = vsel %vm859, %v852, %v856
        %v861 = vand.u32 2147483647, %v851
        %vm862 = vcmp.eq.f32.partialorder %v861, 8.507059e+37
        %v863 = vand.u32 %v851, 2147483648
        %v864 = vor.u32 1.1754944e-38, %v863
        %v865 = vsel %vm862, %v864, %v860
        %v866 = vmul.f32 1.0, %v865
        %v867 = vtanh.pop %v847
        %v868 = vmul.f32 %v866, %v815
        %870 = vrot.lane.b32.xlu0 %v867, 32
        %v871 = vpop.permute.xlu0 %870
        %v873 = vmul.f32 %v866, %v871
        %875 = vrot.lane.b32.xlu0 %v873, 32
        %v876 = vpop.permute.xlu0 %875
        %v878 = vadd.f32 %v868, %v876
        %v879 = vtanh.pop %v878
        %881 = vrot.lane.b32.xlu0 %v879, 32
        %v882 = vpop.permute.xlu0 %881
        %v884 = vmul.f32 %v866, %v882
        %886 = vrot.lane.b32.xlu0 %v884, 64
        %v887 = vpop.permute.xlu0 %886
        %v888 = vsel %vm622, %v887, 0
        %890 = vmatpush.msra.mxu0 0.0
        %891 = vmatpush.msra.mxu0 0.0
        %892 = vmatpush.msra.mxu0 0.0
        %893 = vmatpush.msra.mxu0 0.0
        %894 = vmatpush.msra.mxu0 0.0
        %895 = vmatpush.msra.mxu0 0.0
        %896 = vmatpush.msra.mxu0 0.0
        %897 = vmatpush.msra.mxu0 0.0
        %898 = vmatpush.msra.mxu0 0.0
        %899 = vmatpush.msra.mxu0 0.0
        %900 = vmatpush.msra.mxu0 0.0
        %901 = vmatpush.msra.mxu0 0.0
        %902 = vmatpush.msra.mxu0 %v691
        %903 = vmatpush.msra.mxu0 %v690
        %904 = vmatpush.msra.mxu0 %v689
        %905 = vmatpush.msra.mxu0 %v688
        %906 = vmatmul.f32.gmra.mxu0 %v888
        %v907 = vpop.f32.mrf.mxu0
        %v908 = vadd.f32 0.0, %v907
        %909 = vdwg.mxu0
        %v910 = vadd.f32 %v674, %v908
        %v911 = vxor.u32 %v910, 2147483648
        %v912 = vmul.f32 %v911, 1.442695
        %v913 = vpow.pop %v912
        %v914 = vadd.f32 %v913, 1.0
        %v915 = vrcp.pop %v914
        %v916 = vmul.f32 %v914, %v915
        %v917 = vsub.f32 1.0, %v916
        %v918 = vmul.f32 %v915, %v917
        %v919 = vadd.f32 %v915, %v918
        %vm920 = vweird.f32 %v914
        %vm921 = vweird.f32 %v915
        %vm922 = vmor %vm920, %vm921
        %v923 = vsel %vm922, %v915, %v919
        %v924 = vand.u32 2147483647, %v914
        %vm925 = vcmp.eq.f32.partialorder %v924, 8.507059e+37
        %v926 = vand.u32 %v914, 2147483648
        %v927 = vor.u32 1.1754944e-38, %v926
        %v928 = vsel %vm925, %v927, %v923
        %v929 = vmul.f32 1.0, %v928
        %v930 = vtanh.pop %v910
        %v931 = vmul.f32 %v929, %v878
        %933 = vrot.lane.b32.xlu0 %v930, 32
        %v934 = vpop.permute.xlu0 %933
        %v936 = vmul.f32 %v929, %v934
        %938 = vrot.lane.b32.xlu0 %v936, 32
        %v939 = vpop.permute.xlu0 %938
        %v941 = vadd.f32 %v931, %v939
        %v942 = vtanh.pop %v941
        %944 = vrot.lane.b32.xlu0 %v942, 32
        %v945 = vpop.permute.xlu0 %944
        %v947 = vmul.f32 %v929, %v945
        %949 = vrot.lane.b32.xlu0 %v947, 64
        %v950 = vpop.permute.xlu0 %949
        %v951 = vsel %vm622, %v950, 0
        %953 = vmatpush.msra.mxu0 0.0
        %954 = vmatpush.msra.mxu0 0.0
        %955 = vmatpush.msra.mxu0 0.0
        %956 = vmatpush.msra.mxu0 0.0
        %957 = vmatpush.msra.mxu0 0.0
        %958 = vmatpush.msra.mxu0 0.0
        %959 = vmatpush.msra.mxu0 0.0
        %960 = vmatpush.msra.mxu0 0.0
        %961 = vmatpush.msra.mxu0 0.0
        %962 = vmatpush.msra.mxu0 0.0
        %963 = vmatpush.msra.mxu0 0.0
        %964 = vmatpush.msra.mxu0 0.0
        %965 = vmatpush.msra.mxu0 %v691
        %966 = vmatpush.msra.mxu0 %v690
        %967 = vmatpush.msra.mxu0 %v689
        %968 = vmatpush.msra.mxu0 %v688
        %969 = vmatmul.f32.gmra.mxu0 %v951
        %v970 = vpop.f32.mrf.mxu0
        %v971 = vadd.f32 0.0, %v970
        %972 = vdwg.mxu0
        %v973 = vadd.f32 %v677, %v971
        %v974 = vxor.u32 %v973, 2147483648
        %v975 = vmul.f32 %v974, 1.442695
        %v976 = vpow.pop %v975
        %v977 = vadd.f32 %v976, 1.0
        %v978 = vrcp.pop %v977
        %v979 = vmul.f32 %v977, %v978
        %v980 = vsub.f32 1.0, %v979
        %v981 = vmul.f32 %v978, %v980
        %v982 = vadd.f32 %v978, %v981
        %vm983 = vweird.f32 %v977
        %vm984 = vweird.f32 %v978
        %vm985 = vmor %vm983, %vm984
        %v986 = vsel %vm985, %v978, %v982
        %v987 = vand.u32 2147483647, %v977
        %vm988 = vcmp.eq.f32.partialorder %v987, 8.507059e+37
        %v989 = vand.u32 %v977, 2147483648
        %v990 = vor.u32 1.1754944e-38, %v989
        %v991 = vsel %vm988, %v990, %v986
        %v992 = vmul.f32 1.0, %v991
        %v993 = vtanh.pop %v973
        %v994 = vmul.f32 %v992, %v941
        %996 = vrot.lane.b32.xlu0 %v993, 32
        %v997 = vpop.permute.xlu0 %996
        %v999 = vmul.f32 %v992, %v997
        %1001 = vrot.lane.b32.xlu0 %v999, 32
        %v1002 = vpop.permute.xlu0 %1001
        %v1004 = vadd.f32 %v994, %v1002
        %v1005 = vtanh.pop %v1004
        %1007 = vrot.lane.b32.xlu0 %v1005, 32
        %v1008 = vpop.permute.xlu0 %1007
        %v1010 = vmul.f32 %v992, %v1008
        %1012 = vrot.lane.b32.xlu0 %v1010, 64
        %v1013 = vpop.permute.xlu0 %1012
        %v1014 = vsel %vm622, %v1013, 0
        %1016 = vmatpush.msra.mxu0 0.0
        %1017 = vmatpush.msra.mxu0 0.0
        %1018 = vmatpush.msra.mxu0 0.0
        %1019 = vmatpush.msra.mxu0 0.0
        %1020 = vmatpush.msra.mxu0 0.0
        %1021 = vmatpush.msra.mxu0 0.0
        %1022 = vmatpush.msra.mxu0 0.0
        %1023 = vmatpush.msra.mxu0 0.0
        %1024 = vmatpush.msra.mxu0 0.0
        %1025 = vmatpush.msra.mxu0 0.0
        %1026 = vmatpush.msra.mxu0 0.0
        %1027 = vmatpush.msra.mxu0 0.0
        %1028 = vmatpush.msra.mxu0 %v691
        %1029 = vmatpush.msra.mxu0 %v690
        %1030 = vmatpush.msra.mxu0 %v689
        %1031 = vmatpush.msra.mxu0 %v688
        %1032 = vmatmul.f32.gmra.mxu0 %v1014
        %v1033 = vpop.f32.mrf.mxu0
        %v1034 = vadd.f32 0.0, %v1033
        %1035 = vdwg.mxu0
        %v1036 = vadd.f32 %v680, %v1034
        %v1037 = vxor.u32 %v1036, 2147483648
        %v1038 = vmul.f32 %v1037, 1.442695
        %v1039 = vpow.pop %v1038
        %v1040 = vadd.f32 %v1039, 1.0
        %v1041 = vrcp.pop %v1040
        %v1042 = vmul.f32 %v1040, %v1041
        %v1043 = vsub.f32 1.0, %v1042
        %v1044 = vmul.f32 %v1041, %v1043
        %v1045 = vadd.f32 %v1041, %v1044
        %vm1046 = vweird.f32 %v1040
        %vm1047 = vweird.f32 %v1041
        %vm1048 = vmor %vm1046, %vm1047
        %v1049 = vsel %vm1048, %v1041, %v1045
        %v1050 = vand.u32 2147483647, %v1040
        %vm1051 = vcmp.eq.f32.partialorder %v1050, 8.507059e+37
        %v1052 = vand.u32 %v1040, 2147483648
        %v1053 = vor.u32 1.1754944e-38, %v1052
        %v1054 = vsel %vm1051, %v1053, %v1049
        %v1055 = vmul.f32 1.0, %v1054
        %v1056 = vtanh.pop %v1036
        %v1057 = vmul.f32 %v1055, %v1004
        %1059 = vrot.lane.b32.xlu0 %v1056, 32
        %v1060 = vpop.permute.xlu0 %1059
        %v1062 = vmul.f32 %v1055, %v1060
        %1064 = vrot.lane.b32.xlu0 %v1062, 32
        %v1065 = vpop.permute.xlu0 %1064
        %v1067 = vadd.f32 %v1057, %v1065
        %v1068 = vtanh.pop %v1067
        %1070 = vrot.lane.b32.xlu0 %v1068, 32
        %v1071 = vpop.permute.xlu0 %1070
        %v1073 = vmul.f32 %v1055, %v1071
        %1075 = vrot.lane.b32.xlu0 %v1073, 64
        %v1076 = vpop.permute.xlu0 %1075
        %v1077 = vsel %vm622, %v1076, 0
        %1079 = vmatpush.msra.mxu0 0.0
        %1080 = vmatpush.msra.mxu0 0.0
        %1081 = vmatpush.msra.mxu0 0.0
        %1082 = vmatpush.msra.mxu0 0.0
        %1083 = vmatpush.msra.mxu0 0.0
        %1084 = vmatpush.msra.mxu0 0.0
        %1085 = vmatpush.msra.mxu0 0.0
        %1086 = vmatpush.msra.mxu0 0.0
        %1087 = vmatpush.msra.mxu0 0.0
        %1088 = vmatpush.msra.mxu0 0.0
        %1089 = vmatpush.msra.mxu0 0.0
        %1090 = vmatpush.msra.mxu0 0.0
        %1091 = vmatpush.msra.mxu0 %v691
        %1092 = vmatpush.msra.mxu0 %v690
        %1093 = vmatpush.msra.mxu0 %v689
        %1094 = vmatpush.msra.mxu0 %v688
        %1095 = vmatmul.f32.gmra.mxu0 %v1077
        %v1096 = vpop.f32.mrf.mxu0
        %v1097 = vadd.f32 0.0, %v1096
        %1098 = vdwg.mxu0
        %v1099 = vadd.f32 %v683, %v1097
        %v1100 = vxor.u32 %v1099, 2147483648
        %v1101 = vmul.f32 %v1100, 1.442695
        %v1102 = vpow.pop %v1101
        %v1103 = vadd.f32 %v1102, 1.0
        %v1104 = vrcp.pop %v1103
        %v1105 = vmul.f32 %v1103, %v1104
        %v1106 = vsub.f32 1.0, %v1105
        %v1107 = vmul.f32 %v1104, %v1106
        %v1108 = vadd.f32 %v1104, %v1107
        %vm1109 = vweird.f32 %v1103
        %vm1110 = vweird.f32 %v1104
        %vm1111 = vmor %vm1109, %vm1110
        %v1112 = vsel %vm1111, %v1104, %v1108
        %v1113 = vand.u32 2147483647, %v1103
        %vm1114 = vcmp.eq.f32.partialorder %v1113, 8.507059e+37
        %v1115 = vand.u32 %v1103, 2147483648
        %v1116 = vor.u32 1.1754944e-38, %v1115
        %v1117 = vsel %vm1114, %v1116, %v1112
        %v1118 = vmul.f32 1.0, %v1117
        %v1119 = vtanh.pop %v1099
        %v1120 = vmul.f32 %v1118, %v1067
        %1122 = vrot.lane.b32.xlu0 %v1119, 32
        %v1123 = vpop.permute.xlu0 %1122
        %v1125 = vmul.f32 %v1118, %v1123
        %1127 = vrot.lane.b32.xlu0 %v1125, 32
        %v1128 = vpop.permute.xlu0 %1127
        %v1130 = vadd.f32 %v1120, %v1128
        %v1131 = vtanh.pop %v1130
        %1133 = vrot.lane.b32.xlu0 %v1131, 32
        %v1134 = vpop.permute.xlu0 %1133
        %v1136 = vmul.f32 %v1118, %v1134
        %1138 = vrot.lane.b32.xlu0 %v1136, 64
        %v1139 = vpop.permute.xlu0 %1138
        %v1140 = vsel %vm622, %v1139, 0
        %1142 = vmatpush.msra.mxu0 0.0
        %1143 = vmatpush.msra.mxu0 0.0
        %1144 = vmatpush.msra.mxu0 0.0
        %1145 = vmatpush.msra.mxu0 0.0
        %1146 = vmatpush.msra.mxu0 0.0
        %1147 = vmatpush.msra.mxu0 0.0
        %1148 = vmatpush.msra.mxu0 0.0
        %1149 = vmatpush.msra.mxu0 0.0
        %1150 = vmatpush.msra.mxu0 0.0
        %1151 = vmatpush.msra.mxu0 0.0
        %1152 = vmatpush.msra.mxu0 0.0
        %1153 = vmatpush.msra.mxu0 0.0
        %1154 = vmatpush.msra.mxu0 %v691
        %1155 = vmatpush.msra.mxu0 %v690
        %1156 = vmatpush.msra.mxu0 %v689
        %1157 = vmatpush.msra.mxu0 %v688
        %1158 = vmatmul.f32.gmra.mxu0 %v1140
        %v1159 = vpop.f32.mrf.mxu0
        %v1160 = vadd.f32 0.0, %v1159
        %1161 = vdwg.mxu0
        %v1162 = vadd.f32 %v686, %v1160
        %v1163 = vxor.u32 %v1162, 2147483648
        %v1164 = vmul.f32 %v1163, 1.442695
        %v1165 = vpow.pop %v1164
        %v1166 = vadd.f32 %v1165, 1.0
        %v1167 = vrcp.pop %v1166
        %v1168 = vmul.f32 %v1166, %v1167
        %v1169 = vsub.f32 1.0, %v1168
        %v1170 = vmul.f32 %v1167, %v1169
        %v1171 = vadd.f32 %v1167, %v1170
        %vm1172 = vweird.f32 %v1166
        %vm1173 = vweird.f32 %v1167
        %vm1174 = vmor %vm1172, %vm1173
        %v1175 = vsel %vm1174, %v1167, %v1171
        %v1176 = vand.u32 2147483647, %v1166
        %vm1177 = vcmp.eq.f32.partialorder %v1176, 8.507059e+37
        %v1178 = vand.u32 %v1166, 2147483648
        %v1179 = vor.u32 1.1754944e-38, %v1178
        %v1180 = vsel %vm1177, %v1179, %v1175
        %v1181 = vmul.f32 1.0, %v1180
        %v1182 = vtanh.pop %v1162
        %v1183 = vmul.f32 %v1181, %v1130
        %1185 = vrot.lane.b32.xlu0 %v1182, 32
        %v1186 = vpop.permute.xlu0 %1185
        %v1188 = vmul.f32 %v1181, %v1186
        %1190 = vrot.lane.b32.xlu0 %v1188, 32
        %v1191 = vpop.permute.xlu0 %1190
        %v1193 = vadd.f32 %v1183, %v1191
        %v1194 = vtanh.pop %v1193
        %1196 = vrot.lane.b32.xlu0 %v1194, 32
        %v1197 = vpop.permute.xlu0 %1196
        %v1199 = vmul.f32 %v1181, %v1197
        %v1200 = vld [vmem:[%s8] sm:$0xff]
        %v1201 = vld [vmem:[%s8 + $0x8] sm:$0xff]
        %v1202 = vld [vmem:[%s8 + $0x10] sm:$0xff]
        %v1203 = vld [vmem:[%s8 + $0x18] sm:$0xff]
        %v1204 = vld [vmem:[%s9] sm:$0x1]
        %v1206 = vperm.slane %v1204, 0
        %1209 = vrot.lane.b32.xlu0 %v1199, 64
        %v1210 = vpop.permute.xlu0 %1209
        %v1211 = vsel %vm622, %v1210, 0
        %1213 = vmatpush.msra.mxu0 0.0
        %1214 = vmatpush.msra.mxu0 0.0
        %1215 = vmatpush.msra.mxu0 0.0
        %1216 = vmatpush.msra.mxu0 0.0
        %1217 = vmatpush.msra.mxu0 0.0
        %1218 = vmatpush.msra.mxu0 0.0
        %1219 = vmatpush.msra.mxu0 0.0
        %1220 = vmatpush.msra.mxu0 0.0
        %1221 = vmatpush.msra.mxu0 0.0
        %1222 = vmatpush.msra.mxu0 0.0
        %1223 = vmatpush.msra.mxu0 0.0
        %1224 = vmatpush.msra.mxu0 0.0
        %1225 = vmatpush.msra.mxu0 %v1203
        %1226 = vmatpush.msra.mxu0 %v1202
        %1227 = vmatpush.msra.mxu0 %v1201
        %1228 = vmatpush.msra.mxu0 %v1200
        %1229 = vmatmul.f32.gmra.mxu0 %v762
        %v1230 = vpop.f32.mrf.mxu0
        %v1231 = vadd.f32 %v1206, %v1230
        %1232 = vmatmul.f32.gmra.mxu0 %v825
        %v1233 = vpop.f32.mrf.mxu0
        %v1234 = vadd.f32 %v1206, %v1233
        %1235 = vmatmul.f32.gmra.mxu0 %v888
        %v1236 = vpop.f32.mrf.mxu0
        %v1237 = vadd.f32 %v1206, %v1236
        %1238 = vmatmul.f32.gmra.mxu0 %v951
        %v1239 = vpop.f32.mrf.mxu0
        %v1240 = vadd.f32 %v1206, %v1239
        %1241 = vmatmul.f32.gmra.mxu0 %v1014
        %v1242 = vpop.f32.mrf.mxu0
        %v1243 = vadd.f32 %v1206, %v1242
        %1244 = vmatmul.f32.gmra.mxu0 %v1077
        %v1245 = vpop.f32.mrf.mxu0
        %v1246 = vadd.f32 %v1206, %v1245
        %1247 = vmatmul.f32.gmra.mxu0 %v1140
        %v1248 = vpop.f32.mrf.mxu0
        %v1249 = vadd.f32 %v1206, %v1248
        %1250 = vmatmul.f32.gmra.mxu0 %v1211
        %v1251 = vpop.f32.mrf.mxu0
        %v1252 = vadd.f32 %v1206, %v1251
        %1253 = vdwg.mxu0
        %vm1254 = vcmask 31744
        %1255 = vst.msk [vmem:[%s503] sm:$0xff] %vm1254, %v1231
        %1256 = vst.msk [vmem:[%s503 + $0x8] sm:$0xff] %vm1254, %v1234
        %1257 = vst.msk [vmem:[%s503 + $0x10] sm:$0xff] %vm1254, %v1237
        %1258 = vst.msk [vmem:[%s503 + $0x18] sm:$0xff] %vm1254, %v1240
        %1259 = vst.msk [vmem:[%s503 + $0x20] sm:$0xff] %vm1254, %v1243
        %1260 = vst.msk [vmem:[%s503 + $0x28] sm:$0xff] %vm1254, %v1246
        %1261 = vst.msk [vmem:[%s503 + $0x30] sm:$0xff] %vm1254, %v1249
        %1262 = vst.msk [vmem:[%s503 + $0x38] sm:$0xff] %vm1254, %v1252
        %1264 = vst.msk [vmem:[%s510] sm:$0xff] %vm622, %v1210
        %1266 = vrot.lane.b32.xlu0 %v1193, 96
        %v1267 = vpop.permute.xlu0 %1266
        %1269 = vst.msk [vmem:[%s517] sm:$0xff] %vm622, %v1267
        %s1270 = sand.u32 %s263, 1
        %s1271 = sand.u32 %s263, 1
        %s1272 = smul.addr %s1271, 64
        %s1273 = scalar_lea.vmem [#allocation3], %s1272
        %s1274 = sand.u32 %s289, 1
        %s1275 = scalar_lea.sflag [#allocation5], %s1274
        %s1276 = sand.u32 %s289, 1
        %s1277 = smul.addr %s1276, 8
        %s1278 = scalar_lea.vmem [#allocation4], %s1277
        %s1279 = sand.u32 %s315, 1
        %s1280 = scalar_lea.sflag [#allocation7], %s1279
        %s1281 = sand.u32 %s315, 1
        %s1282 = smul.addr %s1281, 8
        %s1283 = scalar_lea.vmem [#allocation6], %s1282
        // Predicated region
        $region99: #{lstm_forward.1} parent=93 // pred_check
          %p1284 = pneg %p273
        $region100: #{lstm_forward.1} parent=93 // pred_check_branch
          %1286 = sbr.rel (%p1284) target = $region102
        $region101: #{lstm_forward.1} parent=93 // pred_region
          %s1287 = smul.addr %s30, 8
          %s1288 = scalar_lea.vmem %s10, %s1287
          // Predicated region
          $region103: #{lstm_forward.1} parent=101 // pred_check
            _
          $region104: #{lstm_forward.1} parent=101 // pred_check_branch
            %1290 = sbr.rel (0) target = $region106
          $region105: #{lstm_forward.1} parent=101 // pred_region
            // Predicated region
            $region107: #{lstm_forward.1} parent=105 // pred_check
              _
            $region108: #{lstm_forward.1} parent=105 // pred_check_branch
              %1292 = sbr.rel (0) target = $region110
            $region109: #{lstm_forward.1} parent=105 // pred_region
              // Predicated region
              $region122: #{lstm_forward.1} parent=109 // pred_check
                _
              $region123: #{lstm_forward.1} parent=109 // pred_check_branch
                %1322 = sbr.rel (0) target = $region125
              $region124: #{lstm_forward.1} parent=109 // pred_region
                loop: start=0, step=1, limit=1
                $region126: #{lstm_forward.1} parent=124 // loop_pre_header
                  _
                $region127: #{lstm_forward.1} parent=124 // loop_header
                  %s1324 = sphi 0, %s1328
                  %p1325 = scmp.ge.s32.totalorder %s1324, 1
                  %s1329 = sphi %s1273, %s1273
                  %s1330 = sphi %s1288, %s1288
                $region128: #{lstm_forward.1} parent=124 // loop_header_branch
                  %1327 = sbr.rel (%p1325) target = $region132
                $region129: #{lstm_forward.1} parent=124 // loop_body
                  %v1331 = vld [vmem:[%s1329] sm:$0xff]
                  %1332 = vst [vmem:[%s1330] sm:$0xff] %v1331
                  %v1333 = vld [vmem:[%s1329 + $0x8] sm:$0xff]
                  %1334 = vst [vmem:[%s1330 + $0x10] sm:$0xff] %v1333
                  %v1335 = vld [vmem:[%s1329 + $0x10] sm:$0xff]
                  %1336 = vst [vmem:[%s1330 + $0x20] sm:$0xff] %v1335
                  %v1337 = vld [vmem:[%s1329 + $0x18] sm:$0xff]
                  %1338 = vst [vmem:[%s1330 + $0x30] sm:$0xff] %v1337
                  %v1339 = vld [vmem:[%s1329 + $0x20] sm:$0xff]
                  %1340 = vst [vmem:[%s1330 + $0x40] sm:$0xff] %v1339
                  %v1341 = vld [vmem:[%s1329 + $0x28] sm:$0xff]
                  %1342 = vst [vmem:[%s1330 + $0x50] sm:$0xff] %v1341
                  %v1343 = vld [vmem:[%s1329 + $0x30] sm:$0xff]
                  %1344 = vst [vmem:[%s1330 + $0x60] sm:$0xff] %v1343
                  %v1345 = vld [vmem:[%s1329 + $0x38] sm:$0xff]
                  %1346 = vst [vmem:[%s1330 + $0x70] sm:$0xff] %v1345
                $region130: #{lstm_forward.1} parent=124 // loop_footer
                  %s1328 = sadd.s32 1, %s1324
                $region131: #{lstm_forward.1} parent=124 // loop_footer_branch
                  %1323 = sbr.rel target = $region127
                $region132: #{lstm_forward.1} parent=124 // loop_exit
                  _
              $region125: #{lstm_forward.1} parent=109 // pred_fallthru
                _
              // Predicated region
              $region133: #{lstm_forward.1} parent=109 // pred_check
                _
              $region134: #{lstm_forward.1} parent=109 // pred_check_branch
                %1348 = sbr.rel target = $region136
              $region135: #{lstm_forward.1} parent=109 // pred_region
                _
              $region136: #{lstm_forward.1} parent=109 // pred_fallthru
                _
            $region110: #{lstm_forward.1} parent=105 // pred_fallthru
              _
            // Predicated region
            $region111: #{lstm_forward.1} parent=105 // pred_check
              _
            $region112: #{lstm_forward.1} parent=105 // pred_check_branch
              %1294 = sbr.rel target = $region114
            $region113: #{lstm_forward.1} parent=105 // pred_region
              %s1296 = ssub.s32 256, 1
              loop: start=0, step=1, limit=1
              $region115: #{lstm_forward.1} parent=113 // loop_pre_header
                _
              $region116: #{lstm_forward.1} parent=113 // loop_header
                %s1298 = sphi 0, %s1302
                %p1299 = scmp.ge.s32.totalorder %s1298, 1
                %s1303 = sphi %s1273, %s1273
                %s1304 = sphi %s1288, %s1288
              $region117: #{lstm_forward.1} parent=113 // loop_header_branch
                %1301 = sbr.rel (%p1299) target = $region121
              $region118: #{lstm_forward.1} parent=113 // loop_body
                %v1305 = vld [vmem:[%s1303] sm:%s1296]
                %1306 = vst [vmem:[%s1304] sm:%s1296] %v1305
                %v1307 = vld [vmem:[%s1303 + $0x8] sm:%s1296]
                %1308 = vst [vmem:[%s1304 + $0x10] sm:%s1296] %v1307
                %v1309 = vld [vmem:[%s1303 + $0x10] sm:%s1296]
                %1310 = vst [vmem:[%s1304 + $0x20] sm:%s1296] %v1309
                %v1311 = vld [vmem:[%s1303 + $0x18] sm:%s1296]
                %1312 = vst [vmem:[%s1304 + $0x30] sm:%s1296] %v1311
                %v1313 = vld [vmem:[%s1303 + $0x20] sm:%s1296]
                %1314 = vst [vmem:[%s1304 + $0x40] sm:%s1296] %v1313
                %v1315 = vld [vmem:[%s1303 + $0x28] sm:%s1296]
                %1316 = vst [vmem:[%s1304 + $0x50] sm:%s1296] %v1315
                %v1317 = vld [vmem:[%s1303 + $0x30] sm:%s1296]
                %1318 = vst [vmem:[%s1304 + $0x60] sm:%s1296] %v1317
                %v1319 = vld [vmem:[%s1303 + $0x38] sm:%s1296]
                %1320 = vst [vmem:[%s1304 + $0x70] sm:%s1296] %v1319
              $region119: #{lstm_forward.1} parent=113 // loop_footer
                %s1302 = sadd.s32 1, %s1298
              $region120: #{lstm_forward.1} parent=113 // loop_footer_branch
                %1297 = sbr.rel target = $region116
              $region121: #{lstm_forward.1} parent=113 // loop_exit
                _
            $region114: #{lstm_forward.1} parent=105 // pred_fallthru
              _
          $region106: #{lstm_forward.1} parent=101 // pred_fallthru
            _
          %1349 = vnop
        $region102: #{lstm_forward.1} parent=93 // pred_fallthru
          _
        // Predicated region
        $region137: #{lstm_forward.1} parent=93 // pred_check
          %p1350 = pneg %p299
        $region138: #{lstm_forward.1} parent=93 // pred_check_branch
          %1352 = sbr.rel (%p1350) target = $region140
        $region139: #{lstm_forward.1} parent=93 // pred_region
          %1354 = vsyncadd %s1275, 0
          %s1355 = smul.addr %s30, 8
          %s1356 = scalar_lea.hbm %s11, %s1355
          %s1358 = sshll.u32 %s1278, 4
          %s1359 = int_to_ptr.vmem [resolvable:$true] %s1358
          %s1360 = sshll.u32 %s1356, 4
          %s1361 = int_to_ptr.hbm [resolvable:$true] %s1360
          %1363 = dma.vmem_to_hbm [thread:$0]  %s1359, 128, %s1361, %s1275
        $region140: #{lstm_forward.1} parent=93 // pred_fallthru
          _
        // Predicated region
        $region141: #{lstm_forward.1} parent=93 // pred_check
          %p1364 = pneg %p325
        $region142: #{lstm_forward.1} parent=93 // pred_check_branch
          %1366 = sbr.rel (%p1364) target = $region144
        $region143: #{lstm_forward.1} parent=93 // pred_region
          %1368 = vsyncadd %s1280, 0
          %s1369 = smul.addr %s30, 8
          %s1370 = scalar_lea.hbm %s12, %s1369
          %s1372 = sshll.u32 %s1283, 4
          %s1373 = int_to_ptr.vmem [resolvable:$true] %s1372
          %s1374 = sshll.u32 %s1370, 4
          %s1375 = int_to_ptr.hbm [resolvable:$true] %s1374
          %1377 = dma.vmem_to_hbm [thread:$0]  %s1373, 128, %s1375, %s1280
        $region144: #{lstm_forward.1} parent=93 // pred_fallthru
          _
      $region94: #{lstm_forward.1} parent=5 // pred_fallthru
        _
      %p1378 = scmp.le.s32.totalorder 2, %s25
      // Predicated region
      $region145: #{lstm_forward.1} parent=5 // pred_check
        %p1379 = pneg %p1378
      $region146: #{lstm_forward.1} parent=5 // pred_check_branch
        %1381 = sbr.rel (%p1379) target = $region148
      $region147: #{lstm_forward.1} parent=5 // pred_region
        %s1382 = ssub.s32 %s25, 2
        // Predicated region
        $region149: #{lstm_forward.1} parent=147 // pred_check
          %p1383 = pneg %p279
        $region150: #{lstm_forward.1} parent=147 // pred_check_branch
          %1385 = sbr.rel (%p1383) target = $region152
        $region151: #{lstm_forward.1} parent=147 // pred_region
          %s1386 = sand.u32 %s264, 1
          %s1387 = sand.u32 %s264, 1
          %s1388 = smul.addr %s1387, 64
          %s1389 = scalar_lea.vmem [#allocation3], %s1388
        $region152: #{lstm_forward.1} parent=147 // pred_fallthru
          _
        // Predicated region
        $region153: #{lstm_forward.1} parent=147 // pred_check
          %p1390 = pneg %p305
        $region154: #{lstm_forward.1} parent=147 // pred_check_branch
          %1392 = sbr.rel (%p1390) target = $region156
        $region155: #{lstm_forward.1} parent=147 // pred_region
          %s1393 = sand.u32 %s290, 1
          %s1394 = scalar_lea.sflag [#allocation5], %s1393
          %s1395 = sand.u32 %s290, 1
          %s1396 = smul.addr %s1395, 8
          %s1397 = scalar_lea.vmem [#allocation4], %s1396
          %1399 = dma.done %s1394, 128
        $region156: #{lstm_forward.1} parent=147 // pred_fallthru
          _
        // Predicated region
        $region157: #{lstm_forward.1} parent=147 // pred_check
          %p1400 = pneg %p331
        $region158: #{lstm_forward.1} parent=147 // pred_check_branch
          %1402 = sbr.rel (%p1400) target = $region160
        $region159: #{lstm_forward.1} parent=147 // pred_region
          %s1403 = sand.u32 %s316, 1
          %s1404 = scalar_lea.sflag [#allocation7], %s1403
          %s1405 = sand.u32 %s316, 1
          %s1406 = smul.addr %s1405, 8
          %s1407 = scalar_lea.vmem [#allocation6], %s1406
          %1409 = dma.done %s1404, 128
        $region160: #{lstm_forward.1} parent=147 // pred_fallthru
          _
      $region148: #{lstm_forward.1} parent=5 // pred_fallthru
        _
    $region6: #{lstm_forward.1} parent=1 // loop_footer
      %s29 = sadd.s32 1, %s25
    $region7: #{lstm_forward.1} parent=1 // loop_footer_branch
      %24 = sbr.rel target = $region3
    $region8: #{lstm_forward.1} parent=1 // loop_exit
      _
    %1410 = vsyncpa [#allocation5], 1
    %s1411 = scalar_lea.sflag [#allocation5], 1
    %1412 = vsyncpa %s1411, 1
    %1413 = vsyncpa [#allocation7], 1
    %s1414 = scalar_lea.sflag [#allocation7], 1
    %1415 = vsyncpa %s1414, 1

</llo_original>
